<compile_context>
chip_gen: v7x
topology: tpu7x:2x2x1
jax: 0.10.0
libtpu: 0.0.40
codegen_flags: <defaults>
</compile_context>

<pallas_src>
import numpy as np

import jax
import jax.numpy as jnp
from jax.experimental import pallas as pl
from jax.experimental.pallas import tpu as pltpu

NEG_SLOPE = 0.01                 # F.leaky_relu default negative_slope
WEIGHT_DTYPE = jnp.bfloat16      # matmul operand dtype (f32 accumulation)


def _leaky(x):
    return jnp.where(x >= 0, x, NEG_SLOPE * x)


# ----------------------------------------------------------------------------
# Init-time glue: exact lowering of a valid 3x3 conv (stride 1) to a matmul.
# ----------------------------------------------------------------------------
def _unfold_conv3x3(w, b, hin, win):
    """w: [cout, cin, 3, 3] (torch layout), b: [cout].

    Returns
      U    : [cin*hin*win, cout*ho*wo]  dense matrix such that
             flatten_nchw(conv(x)) == flatten_nchw(x) @ U   (exact)
      bflat: [cout*ho*wo]               bias broadcast over spatial positions
    Row order of U  = (ci, h, w)  flatten of the input feature map.
    Col order of U  = (co, i, j)  = torch NCHW flatten of the conv output.
    """
    w = np.asarray(w, np.float32)
    b = np.asarray(b, np.float32)
    cout, cin, kh, kw = w.shape
    ho, wo = hin - kh + 1, win - kw + 1
    U = np.zeros((cin * hin * win, cout * ho * wo), np.float32)
    ii, jj = np.meshgrid(np.arange(ho), np.arange(wo), indexing="ij")
    cols_sp = (ii * wo + jj).ravel()
    for co in range(cout):
        for ci in range(cin):
            for dh in range(kh):
                for dw in range(kw):
                    rows = (ci * hin * win + (ii + dh) * win + (jj + dw)).ravel()
                    U[rows, co * ho * wo + cols_sp] = w[co, ci, dh, dw]
    bflat = np.repeat(b, ho * wo)
    return jnp.asarray(U), jnp.asarray(bflat)


# ----------------------------------------------------------------------------
# Fused kernel: 5 MXU matmuls + leaky_relu + dropout-mask multiplies.
# ----------------------------------------------------------------------------
def fused_kernel(x_ref, u1_ref, cb1_ref, u2_ref, cb2_ref, m0_ref,
                 w1_ref, b1_ref, m1_ref, w2_ref, b2_ref, w3_ref, b3_ref,
                 o_ref):
    # conv1 (3x3 valid) as a single matmul against the unfolded weight.
    a = _leaky(jnp.dot(x_ref[...].astype(u1_ref.dtype), u1_ref[...],
                       preferred_element_type=jnp.float32) + cb1_ref[...])
    # conv2; output is already the torch NCHW flatten (lane-dense, C2*Ho2*Wo2).
    a = _leaky(jnp.dot(a.astype(u2_ref.dtype), u2_ref[...],
                       preferred_element_type=jnp.float32) + cb2_ref[...])
    # dropout after conv2: mask entries are pre-scaled to {0, 1/(1-p)}.
    a = a * m0_ref[...]
    # hl1 + leaky
    a = _leaky(jnp.dot(a.astype(w1_ref.dtype), w1_ref[...],
                       preferred_element_type=jnp.float32) + b1_ref[...])
    # dropout after hl1
    a = a * m1_ref[...]
    # hl2 + leaky
    a = _leaky(jnp.dot(a.astype(w2_ref.dtype), w2_ref[...],
                       preferred_element_type=jnp.float32) + b2_ref[...])
    # hl3 (small, kept f32)
    o_ref[...] = jnp.dot(a, w3_ref[...],
                         preferred_element_type=jnp.float32) + b3_ref[...]


# ----------------------------------------------------------------------------
# Wrapper
# ----------------------------------------------------------------------------
def dropout_cnn_forward(x, params, key, dropout_p=0.2, training=True):
    """x: [B, sequence_len, input_size] f32 -> [B, output_size] f32.

    `training=True` matches F.dropout's default in the reference module
    (dropout is always active there).  RNG stream differs from torch.
    """
    B, S, D = x.shape
    u1w, cb1, u2w, cb2, w1, b1, w2, b2, w3, b3 = params
    flat_conv = u2w.shape[1]          # C2 * (S-4) * (D-4)
    hid = w1.shape[1]                 # 1024
    out_n = w3.shape[1]

    xf = x.reshape(B, S * D)          # NCHW (1 channel) flatten of the input

    if training:
        k0, k1 = jax.random.split(key)
        scale = 1.0 / (1.0 - dropout_p)
        m0 = (jax.random.uniform(k0, (B, flat_conv)) >= dropout_p
              ).astype(jnp.float32) * scale
        m1 = (jax.random.uniform(k1, (B, hid)) >= dropout_p
              ).astype(jnp.float32) * scale
    else:
        m0 = jnp.ones((B, flat_conv), jnp.float32)
        m1 = jnp.ones((B, hid), jnp.float32)

    # Advisory cost estimate for XLA scheduling around this tiny custom call.
    dims = [S * D, u1w.shape[1], flat_conv, hid, w2.shape[1], out_n]
    flops = 2 * B * sum(a * b for a, b in zip(dims[:-1], dims[1:]))
    weight_bytes = sum(int(a.size) * a.dtype.itemsize
                       for a in (u1w, cb1, u2w, cb2, w1, b1, w2, b2, w3, b3))
    act_bytes = 4 * (int(xf.size) + int(m0.size) + int(m1.size) + B * out_n)
    cost = pl.CostEstimate(flops=int(flops), transcendentals=0,
                           bytes_accessed=int(weight_bytes + act_bytes))

    return pl.pallas_call(
        fused_kernel,
        out_shape=jax.ShapeDtypeStruct((B, out_n), jnp.float32),
        in_specs=[pl.BlockSpec(memory_space=pltpu.MemorySpace.VMEM)] * 13,
        out_specs=pl.BlockSpec(memory_space=pltpu.MemorySpace.VMEM),
        cost_estimate=cost,
    )(xf, u1w, cb1, u2w, cb2, m0, w1, b1, m1, w2, b2, w3, b3)


# ----------------------------------------------------------------------------
# Deterministic synthetic parameters (PyTorch-canonical shapes & init),
# then rearranged / unfolded for the kernel.
# ----------------------------------------------------------------------------
def init_params(key, input_size, sequence_len, channel_mult, output_size):
    C1, C2 = 2 * channel_mult, 4 * channel_mult
    Ho1, Wo1 = sequence_len - 2, input_size - 2
    Ho2, Wo2 = sequence_len - 4, input_size - 4
    flat_in = Ho2 * Wo2 * C2
    ks = jax.random.split(key, 10)

    def u(k, shape, fan_in):
        bnd = 1.0 / (fan_in ** 0.5)
        return jax.random.uniform(k, shape, jnp.float32, -bnd, bnd)

    # PyTorch-canonical parameters.
    conv1_w = u(ks[0], (C1, 1, 3, 3), 9)
    conv1_b = u(ks[1], (C1,), 9)
    conv2_w = u(ks[2], (C2, C1, 3, 3), 9 * C1)
    conv2_b = u(ks[3], (C2,), 9 * C1)
    hl1_w = u(ks[4], (1024, flat_in), flat_in)
    hl1_b = u(ks[5], (1024,), flat_in)
    hl2_w = u(ks[6], (128, 1024), 1024)
    hl2_b = u(ks[7], (128,), 1024)
    hl3_w = u(ks[8], (output_size, 128), 128)
    hl3_b = u(ks[9], (output_size,), 128)

    # Exact conv -> matmul unfolding.  U2's columns are in torch NCHW flatten
    # order, so hl1's weight needs no row permutation.
    # NOTE: the unfolded matrices scale as (Hin*Win) x (Ho*Wo*Cout); for much
    # larger spatial sizes switch to im2col on activations instead.
    U1, b1f = _unfold_conv3x3(conv1_w, conv1_b, sequence_len, input_size)
    U2, b2f = _unfold_conv3x3(conv2_w, conv2_b, Ho1, Wo1)

    return (U1.astype(WEIGHT_DTYPE), b1f.reshape(1, -1),
            U2.astype(WEIGHT_DTYPE), b2f.reshape(1, -1),
            jnp.transpose(hl1_w).astype(WEIGHT_DTYPE), hl1_b.reshape(1, -1),
            jnp.transpose(hl2_w).astype(WEIGHT_DTYPE), hl2_b.reshape(1, -1),
            jnp.transpose(hl3_w), hl3_b.reshape(1, -1))


if __name__ == "__main__":
    input_size, sequence_len, channel_mult, output_size = 16, 8, 2, 6
    batch = 2

    key = jax.random.PRNGKey(0)
    pkey, xkey, dkey = jax.random.split(key, 3)
    params = init_params(pkey, input_size, sequence_len, channel_mult, output_size)
    x = jax.random.normal(xkey, (batch, sequence_len, input_size), jnp.float32)

    y = dropout_cnn_forward(x, params, dkey, dropout_p=0.2, training=True)
    y = jax.block_until_ready(y)
    assert y.shape == (batch, output_size)
    assert bool(jnp.all(jnp.isfinite(y)))
    print("KERNEL_OK")
</pallas_src>

<mosaic_0001>
module attributes {stable_mosaic.version = 11 : i64} {
  func.func @fused_kernel(%arg0: memref<2x128xf32, #tpu.memory_space<vmem>>, %arg1: memref<128x336xbf16, #tpu.memory_space<vmem>>, %arg2: memref<1x336xf32, #tpu.memory_space<vmem>>, %arg3: memref<336x384xbf16, #tpu.memory_space<vmem>>, %arg4: memref<1x384xf32, #tpu.memory_space<vmem>>, %arg5: memref<2x384xf32, #tpu.memory_space<vmem>>, %arg6: memref<384x1024xbf16, #tpu.memory_space<vmem>>, %arg7: memref<1x1024xf32, #tpu.memory_space<vmem>>, %arg8: memref<2x1024xf32, #tpu.memory_space<vmem>>, %arg9: memref<1024x128xbf16, #tpu.memory_space<vmem>>, %arg10: memref<1x128xf32, #tpu.memory_space<vmem>>, %arg11: memref<128x6xf32, #tpu.memory_space<vmem>>, %arg12: memref<1x6xf32, #tpu.memory_space<vmem>>, %arg13: memref<2x6xf32, #tpu.memory_space<vmem>>) attributes {dimension_semantics = [], scalar_prefetch = 0 : i64, scratch_operands = 0 : i64, tpu.core_type = #tpu.core_type<tc>} {
    %c0 = arith.constant 0 : index
    %c0_0 = arith.constant 0 : index
    %0 = vector.load %arg0[%c0, %c0_0] : memref<2x128xf32, #tpu.memory_space<vmem>>, vector<2x128xf32>
    %1 = arith.truncf %0 : vector<2x128xf32> to vector<2x128xbf16>
    %c0_1 = arith.constant 0 : index
    %c0_2 = arith.constant 0 : index
    %2 = vector.load %arg1[%c0_1, %c0_2] : memref<128x336xbf16, #tpu.memory_space<vmem>>, vector<128x336xbf16>
    %cst = arith.constant dense<0.000000e+00> : vector<2x336xf32>
    %3 = tpu.matmul %1, %2, %cst {dimension_numbers = #tpu.dot_dimension_numbers<[1], [0], [0], [1], [0, 0, 1, 1], [], []>} : vector<2x128xbf16>, vector<128x336xbf16>, vector<2x336xf32> -> vector<2x336xf32>
    %c0_3 = arith.constant 0 : index
    %c0_4 = arith.constant 0 : index
    %4 = vector.load %arg2[%c0_3, %c0_4] : memref<1x336xf32, #tpu.memory_space<vmem>>, vector<1x336xf32>
    %5 = vector.broadcast %4 : vector<1x336xf32> to vector<2x336xf32>
    %6 = arith.addf %3, %5 : vector<2x336xf32>
    %cst_5 = arith.constant 0.000000e+00 : f32
    %7 = vector.broadcast %cst_5 : f32 to vector<2x336xf32>
    %8 = arith.cmpf oge, %6, %7 : vector<2x336xf32>
    %cst_6 = arith.constant 0.00999999977 : f32
    %9 = vector.broadcast %cst_6 : f32 to vector<2x336xf32>
    %10 = arith.mulf %9, %6 : vector<2x336xf32>
    %11 = arith.select %8, %6, %10 : vector<2x336xi1>, vector<2x336xf32>
    %12 = arith.truncf %11 : vector<2x336xf32> to vector<2x336xbf16>
    %c0_7 = arith.constant 0 : index
    %c0_8 = arith.constant 0 : index
    %13 = vector.load %arg3[%c0_7, %c0_8] : memref<336x384xbf16, #tpu.memory_space<vmem>>, vector<336x384xbf16>
    %cst_9 = arith.constant dense<0.000000e+00> : vector<2x384xf32>
    %14 = tpu.matmul %12, %13, %cst_9 {dimension_numbers = #tpu.dot_dimension_numbers<[1], [0], [0], [1], [0, 0, 1, 1], [], []>} : vector<2x336xbf16>, vector<336x384xbf16>, vector<2x384xf32> -> vector<2x384xf32>
    %c0_10 = arith.constant 0 : index
    %c0_11 = arith.constant 0 : index
    %15 = vector.load %arg4[%c0_10, %c0_11] : memref<1x384xf32, #tpu.memory_space<vmem>>, vector<1x384xf32>
    %16 = vector.broadcast %15 : vector<1x384xf32> to vector<2x384xf32>
    %17 = arith.addf %14, %16 : vector<2x384xf32>
    %cst_12 = arith.constant 0.000000e+00 : f32
    %18 = vector.broadcast %cst_12 : f32 to vector<2x384xf32>
    %19 = arith.cmpf oge, %17, %18 : vector<2x384xf32>
    %cst_13 = arith.constant 0.00999999977 : f32
    %20 = vector.broadcast %cst_13 : f32 to vector<2x384xf32>
    %21 = arith.mulf %20, %17 : vector<2x384xf32>
    %22 = arith.select %19, %17, %21 : vector<2x384xi1>, vector<2x384xf32>
    %c0_14 = arith.constant 0 : index
    %c0_15 = arith.constant 0 : index
    %23 = vector.load %arg5[%c0_14, %c0_15] : memref<2x384xf32, #tpu.memory_space<vmem>>, vector<2x384xf32>
    %24 = arith.mulf %22, %23 : vector<2x384xf32>
    %25 = arith.truncf %24 : vector<2x384xf32> to vector<2x384xbf16>
    %c0_16 = arith.constant 0 : index
    %c0_17 = arith.constant 0 : index
    %26 = vector.load %arg6[%c0_16, %c0_17] : memref<384x1024xbf16, #tpu.memory_space<vmem>>, vector<384x1024xbf16>
    %cst_18 = arith.constant dense<0.000000e+00> : vector<2x1024xf32>
    %27 = tpu.matmul %25, %26, %cst_18 {dimension_numbers = #tpu.dot_dimension_numbers<[1], [0], [0], [1], [0, 0, 1, 1], [], []>} : vector<2x384xbf16>, vector<384x1024xbf16>, vector<2x1024xf32> -> vector<2x1024xf32>
    %c0_19 = arith.constant 0 : index
    %c0_20 = arith.constant 0 : index
    %28 = vector.load %arg7[%c0_19, %c0_20] : memref<1x1024xf32, #tpu.memory_space<vmem>>, vector<1x1024xf32>
    %29 = vector.broadcast %28 : vector<1x1024xf32> to vector<2x1024xf32>
    %30 = arith.addf %27, %29 : vector<2x1024xf32>
    %cst_21 = arith.constant 0.000000e+00 : f32
    %31 = vector.broadcast %cst_21 : f32 to vector<2x1024xf32>
    %32 = arith.cmpf oge, %30, %31 : vector<2x1024xf32>
    %cst_22 = arith.constant 0.00999999977 : f32
    %33 = vector.broadcast %cst_22 : f32 to vector<2x1024xf32>
    %34 = arith.mulf %33, %30 : vector<2x1024xf32>
    %35 = arith.select %32, %30, %34 : vector<2x1024xi1>, vector<2x1024xf32>
    %c0_23 = arith.constant 0 : index
    %c0_24 = arith.constant 0 : index
    %36 = vector.load %arg8[%c0_23, %c0_24] : memref<2x1024xf32, #tpu.memory_space<vmem>>, vector<2x1024xf32>
    %37 = arith.mulf %35, %36 : vector<2x1024xf32>
    %38 = arith.truncf %37 : vector<2x1024xf32> to vector<2x1024xbf16>
    %c0_25 = arith.constant 0 : index
    %c0_26 = arith.constant 0 : index
    %39 = vector.load %arg9[%c0_25, %c0_26] : memref<1024x128xbf16, #tpu.memory_space<vmem>>, vector<1024x128xbf16>
    %cst_27 = arith.constant dense<0.000000e+00> : vector<2x128xf32>
    %40 = tpu.matmul %38, %39, %cst_27 {dimension_numbers = #tpu.dot_dimension_numbers<[1], [0], [0], [1], [0, 0, 1, 1], [], []>} : vector<2x1024xbf16>, vector<1024x128xbf16>, vector<2x128xf32> -> vector<2x128xf32>
    %c0_28 = arith.constant 0 : index
    %c0_29 = arith.constant 0 : index
    %41 = vector.load %arg10[%c0_28, %c0_29] : memref<1x128xf32, #tpu.memory_space<vmem>>, vector<1x128xf32>
    %42 = vector.broadcast %41 : vector<1x128xf32> to vector<2x128xf32>
    %43 = arith.addf %40, %42 : vector<2x128xf32>
    %cst_30 = arith.constant 0.000000e+00 : f32
    %44 = vector.broadcast %cst_30 : f32 to vector<2x128xf32>
    %45 = arith.cmpf oge, %43, %44 : vector<2x128xf32>
    %cst_31 = arith.constant 0.00999999977 : f32
    %46 = vector.broadcast %cst_31 : f32 to vector<2x128xf32>
    %47 = arith.mulf %46, %43 : vector<2x128xf32>
    %48 = arith.select %45, %43, %47 : vector<2x128xi1>, vector<2x128xf32>
    %c0_32 = arith.constant 0 : index
    %c0_33 = arith.constant 0 : index
    %49 = vector.load %arg11[%c0_32, %c0_33] : memref<128x6xf32, #tpu.memory_space<vmem>>, vector<128x6xf32>
    %cst_34 = arith.constant dense<0.000000e+00> : vector<2x6xf32>
    %50 = tpu.matmul %48, %49, %cst_34 {dimension_numbers = #tpu.dot_dimension_numbers<[1], [0], [0], [1], [0, 0, 1, 1], [], []>} : vector<2x128xf32>, vector<128x6xf32>, vector<2x6xf32> -> vector<2x6xf32>
    %c0_35 = arith.constant 0 : index
    %c0_36 = arith.constant 0 : index
    %51 = vector.load %arg12[%c0_35, %c0_36] : memref<1x6xf32, #tpu.memory_space<vmem>>, vector<1x6xf32>
    %52 = vector.broadcast %51 : vector<1x6xf32> to vector<2x6xf32>
    %53 = arith.addf %50, %52 : vector<2x6xf32>
    %c0_37 = arith.constant 0 : index
    %c0_38 = arith.constant 0 : index
    %54 = vector.load %arg13[%c0_37, %c0_38] : memref<2x6xf32, #tpu.memory_space<vmem>>, vector<2x6xf32>
    tpu.vector_store %arg13[%c0_37, %c0_38], %53 {strides = array<i32>} : memref<2x6xf32, #tpu.memory_space<vmem>>, vector<2x6xf32>,
    return
  }
}

</mosaic_0001>

<llo_original>
// kernel: tpu_custom_call.1
$region0: #{tpu_custom_call.1}
  #allocation0 [shape = 'u32[]', space=smem, size = 0x4, offset = 0x4, fixed_abs, tag = 'smem constant byte address 0x4 - core index']
  #allocation1 [shape = 'u32[144,128]{1,0:T(1,128)}', space=vmem, size = 0x12000, scoped, tag = 'internal scratch']
  %s0 = inlined_call_operand.hbm [shape: f32[2,128], index: 0, kind: input, shape index: {}]
  %s1 = inlined_call_operand.vmem [shape: bf16[128,336], index: 1, kind: input, shape index: {}]
  %s2 = inlined_call_operand.hbm [shape: f32[1,336], index: 2, kind: input, shape index: {}]
  %s3 = inlined_call_operand.hbm [shape: bf16[336,384], index: 3, kind: input, shape index: {}]
  %s4 = inlined_call_operand.hbm [shape: f32[1,384], index: 4, kind: input, shape index: {}]
  %s5 = inlined_call_operand.hbm [shape: f32[2,384], index: 5, kind: input, shape index: {}]
  %s6 = inlined_call_operand.hbm [shape: bf16[384,1024], index: 6, kind: input, shape index: {}]
  %s7 = inlined_call_operand.hbm [shape: f32[1,1024], index: 7, kind: input, shape index: {}]
  %s8 = inlined_call_operand.vmem [shape: f32[2,1024], index: 8, kind: input, shape index: {}]
  %s9 = inlined_call_operand.vmem [shape: bf16[1024,128], index: 9, kind: input, shape index: {}]
  %s10 = inlined_call_operand.vmem [shape: f32[1,128], index: 10, kind: input, shape index: {}]
  %s11 = inlined_call_operand.vmem [shape: f32[128,6], index: 11, kind: input, shape index: {}]
  %s12 = inlined_call_operand.vmem [shape: f32[1,6], index: 12, kind: input, shape index: {}]
  %s13 = inlined_call_operand.hbm [shape: f32[2,6], index: 13, kind: output, shape index: {}]
  %s14 = sld [smem:[#allocation0]]
  $region90: #{tpu_custom_call.1} parent=0
    _
  %s16 = ssub.s32 1, %s14
  %s17 = scalar_select 0, %s16, %s14
  $region1: #{tpu_custom_call.1} parent=0
    #allocation2 [shape = 'u8[1024]{0}', space=vmem, size = 0x400, scoped, tag = 'input window, operand 0, single buffered']
    #allocation3 [shape = 's32[1]{0}', space=sflag, size = 0x4, scoped, tag = 'scoped memory for tpu_custom_call.1']
    #allocation4 [shape = 's32[1]{0}', space=sflag, size = 0x4, scoped, tag = 'scoped memory for tpu_custom_call.1']
    #allocation5 [shape = 'u8[1536]{0}', space=vmem, size = 0x800, scoped, tag = 'input window, operand 2, single buffered']
    #allocation6 [shape = 's32[1]{0}', space=sflag, size = 0x4, scoped, tag = 'scoped memory for tpu_custom_call.1']
    #allocation7 [shape = 'u8[258048]{0}', space=vmem, size = 0x3f000, scoped, tag = 'input window, operand 3, single buffered']
    #allocation8 [shape = 'u8[1536]{0}', space=vmem, size = 0x800, scoped, tag = 'input window, operand 4, single buffered']
    #allocation9 [shape = 's32[1]{0}', space=sflag, size = 0x4, scoped, tag = 'scoped memory for tpu_custom_call.1']
    #allocation10 [shape = 'u8[3072]{0}', space=vmem, size = 0xc00, scoped, tag = 'input window, operand 5, single buffered']
    #allocation11 [shape = 'u8[786432]{0}', space=vmem, size = 0xc0000, scoped, tag = 'input window, operand 6, single buffered']
    #allocation12 [shape = 's32[1]{0}', space=sflag, size = 0x4, scoped, tag = 'scoped memory for tpu_custom_call.1']
    #allocation13 [shape = 'u8[4096]{0}', space=vmem, size = 0x1000, scoped, tag = 'input window, operand 7, single buffered']
    #allocation14 [shape = 'u8[1024]{0}', space=vmem, size = 0x400, scoped, tag = 'output window, operand 0, single buffered']
    %18 = vsyncpa [#allocation3], 0
    %19 = vsyncpa [#allocation6], 0
    %20 = vsyncpa [#allocation9], 0
    %21 = vsyncpa [#allocation12], 0
    %22 = vsyncpa [#allocation4], 0
    // Predicated region
    $region2: #{tpu_custom_call.1} parent=1 // pred_check
      _
    $region3: #{tpu_custom_call.1} parent=1 // pred_check_branch
      %24 = sbr.rel (0) target = $region5
    $region4: #{tpu_custom_call.1} parent=1 // pred_region
      %s26 = ssub.s32 32, 32
      %27 = vsyncadd [#allocation3], %s26
      %s29 = sshll.u32 [#allocation2], 4
      %s30 = int_to_ptr.vmem [resolvable:$true] %s29
      %32 = dma.hbm_to_vmem [thread:$0]  %s0, 32, %s30, [#allocation3]
    $region5: #{tpu_custom_call.1} parent=1 // pred_fallthru
      _
    // Predicated region
    $region6: #{tpu_custom_call.1} parent=1 // pred_check
      _
    $region7: #{tpu_custom_call.1} parent=1 // pred_check_branch
      %34 = sbr.rel (0) target = $region9
    $region8: #{tpu_custom_call.1} parent=1 // pred_region
      _
    $region9: #{tpu_custom_call.1} parent=1 // pred_fallthru
      _
    // Predicated region
    $region10: #{tpu_custom_call.1} parent=1 // pred_check
      _
    $region11: #{tpu_custom_call.1} parent=1 // pred_check_branch
      %36 = sbr.rel (0) target = $region13
    $region12: #{tpu_custom_call.1} parent=1 // pred_region
      %s38 = ssub.s32 48, 48
      %39 = vsyncadd [#allocation6], %s38
      %s41 = sshll.u32 [#allocation5], 4
      %s42 = int_to_ptr.vmem [resolvable:$true] %s41
      %44 = dma.hbm_to_vmem [thread:$0]  %s2, 48, %s42, [#allocation6]
    $region13: #{tpu_custom_call.1} parent=1 // pred_fallthru
      _
    // Predicated region
    $region14: #{tpu_custom_call.1} parent=1 // pred_check
      _
    $region15: #{tpu_custom_call.1} parent=1 // pred_check_branch
      %46 = sbr.rel (0) target = $region17
    $region16: #{tpu_custom_call.1} parent=1 // pred_region
      %s48 = ssub.s32 8064, 8064
      %49 = vsyncadd [#allocation6], %s48
      %s50 = sshll.u32 [#allocation7], 4
      %s51 = int_to_ptr.vmem [resolvable:$true] %s50
      %56 = dma.hbm_to_vmem [thread:$0]  %s3, 8064, %s51, [#allocation6], 192, 192, 12
    $region17: #{tpu_custom_call.1} parent=1 // pred_fallthru
      _
    // Predicated region
    $region18: #{tpu_custom_call.1} parent=1 // pred_check
      _
    $region19: #{tpu_custom_call.1} parent=1 // pred_check_branch
      %58 = sbr.rel (0) target = $region21
    $region20: #{tpu_custom_call.1} parent=1 // pred_region
      %s60 = ssub.s32 48, 48
      %61 = vsyncadd [#allocation9], %s60
      %s63 = sshll.u32 [#allocation8], 4
      %s64 = int_to_ptr.vmem [resolvable:$true] %s63
      %66 = dma.hbm_to_vmem [thread:$0]  %s4, 48, %s64, [#allocation9]
    $region21: #{tpu_custom_call.1} parent=1 // pred_fallthru
      _
    // Predicated region
    $region22: #{tpu_custom_call.1} parent=1 // pred_check
      _
    $region23: #{tpu_custom_call.1} parent=1 // pred_check_branch
      %68 = sbr.rel (0) target = $region25
    $region24: #{tpu_custom_call.1} parent=1 // pred_region
      %s70 = ssub.s32 96, 96
      %71 = vsyncadd [#allocation9], %s70
      %s73 = sshll.u32 [#allocation10], 4
      %s74 = int_to_ptr.vmem [resolvable:$true] %s73
      %76 = dma.hbm_to_vmem [thread:$0]  %s5, 96, %s74, [#allocation9]
    $region25: #{tpu_custom_call.1} parent=1 // pred_fallthru
      _
    // Predicated region
    $region26: #{tpu_custom_call.1} parent=1 // pred_check
      _
    $region27: #{tpu_custom_call.1} parent=1 // pred_check_branch
      %78 = sbr.rel (0) target = $region29
    $region28: #{tpu_custom_call.1} parent=1 // pred_region
      %s80 = ssub.s32 24576, 24576
      %81 = vsyncadd [#allocation12], %s80
      %s82 = sshll.u32 [#allocation11], 4
      %s83 = int_to_ptr.vmem [resolvable:$true] %s82
      %88 = dma.hbm_to_vmem [thread:$0]  %s6, 24576, %s83, [#allocation12], 512, 512, 32
    $region29: #{tpu_custom_call.1} parent=1 // pred_fallthru
      _
    // Predicated region
    $region30: #{tpu_custom_call.1} parent=1 // pred_check
      _
    $region31: #{tpu_custom_call.1} parent=1 // pred_check_branch
      %90 = sbr.rel (0) target = $region33
    $region32: #{tpu_custom_call.1} parent=1 // pred_region
      %s92 = ssub.s32 128, 128
      %93 = vsyncadd [#allocation12], %s92
      %s95 = sshll.u32 [#allocation13], 4
      %s96 = int_to_ptr.vmem [resolvable:$true] %s95
      %98 = dma.hbm_to_vmem [thread:$0]  %s7, 128, %s96, [#allocation12]
    $region33: #{tpu_custom_call.1} parent=1 // pred_fallthru
      _
    // Predicated region
    $region34: #{tpu_custom_call.1} parent=1 // pred_check
      _
    $region35: #{tpu_custom_call.1} parent=1 // pred_check_branch
      %100 = sbr.rel (0) target = $region37
    $region36: #{tpu_custom_call.1} parent=1 // pred_region
      _
    $region37: #{tpu_custom_call.1} parent=1 // pred_fallthru
      _
    // Predicated region
    $region38: #{tpu_custom_call.1} parent=1 // pred_check
      _
    $region39: #{tpu_custom_call.1} parent=1 // pred_check_branch
      %102 = sbr.rel (0) target = $region41
    $region40: #{tpu_custom_call.1} parent=1 // pred_region
      _
    $region41: #{tpu_custom_call.1} parent=1 // pred_fallthru
      _
    // Predicated region
    $region42: #{tpu_custom_call.1} parent=1 // pred_check
      _
    $region43: #{tpu_custom_call.1} parent=1 // pred_check_branch
      %104 = sbr.rel (0) target = $region45
    $region44: #{tpu_custom_call.1} parent=1 // pred_region
      _
    $region45: #{tpu_custom_call.1} parent=1 // pred_fallthru
      _
    // Predicated region
    $region46: #{tpu_custom_call.1} parent=1 // pred_check
      _
    $region47: #{tpu_custom_call.1} parent=1 // pred_check_branch
      %106 = sbr.rel (0) target = $region49
    $region48: #{tpu_custom_call.1} parent=1 // pred_region
      _
    $region49: #{tpu_custom_call.1} parent=1 // pred_fallthru
      _
    // Predicated region
    $region50: #{tpu_custom_call.1} parent=1 // pred_check
      _
    $region51: #{tpu_custom_call.1} parent=1 // pred_check_branch
      %108 = sbr.rel (0) target = $region53
    $region52: #{tpu_custom_call.1} parent=1 // pred_region
      _
    $region53: #{tpu_custom_call.1} parent=1 // pred_fallthru
      _
    // Predicated region
    $region54: #{tpu_custom_call.1} parent=1 // pred_check
      _
    $region55: #{tpu_custom_call.1} parent=1 // pred_check_branch
      %110 = sbr.rel (0) target = $region57
    $region56: #{tpu_custom_call.1} parent=1 // pred_region
      %111 = dma.done [#allocation3], 32
    $region57: #{tpu_custom_call.1} parent=1 // pred_fallthru
      _
    // Predicated region
    $region58: #{tpu_custom_call.1} parent=1 // pred_check
      _
    $region59: #{tpu_custom_call.1} parent=1 // pred_check_branch
      %113 = sbr.rel (0) target = $region61
    $region60: #{tpu_custom_call.1} parent=1 // pred_region
      %114 = dma.done [#allocation6], 48
    $region61: #{tpu_custom_call.1} parent=1 // pred_fallthru
      _
    // Predicated region
    $region62: #{tpu_custom_call.1} parent=1 // pred_check
      _
    $region63: #{tpu_custom_call.1} parent=1 // pred_check_branch
      %116 = sbr.rel (0) target = $region65
    $region64: #{tpu_custom_call.1} parent=1 // pred_region
      %117 = dma.done [#allocation6], 8064
    $region65: #{tpu_custom_call.1} parent=1 // pred_fallthru
      _
    // Predicated region
    $region66: #{tpu_custom_call.1} parent=1 // pred_check
      _
    $region67: #{tpu_custom_call.1} parent=1 // pred_check_branch
      %119 = sbr.rel (0) target = $region69
    $region68: #{tpu_custom_call.1} parent=1 // pred_region
      %120 = dma.done [#allocation9], 48
    $region69: #{tpu_custom_call.1} parent=1 // pred_fallthru
      _
    // Predicated region
    $region70: #{tpu_custom_call.1} parent=1 // pred_check
      _
    $region71: #{tpu_custom_call.1} parent=1 // pred_check_branch
      %122 = sbr.rel (0) target = $region73
    $region72: #{tpu_custom_call.1} parent=1 // pred_region
      %123 = dma.done [#allocation9], 96
    $region73: #{tpu_custom_call.1} parent=1 // pred_fallthru
      _
    // Predicated region
    $region74: #{tpu_custom_call.1} parent=1 // pred_check
      _
    $region75: #{tpu_custom_call.1} parent=1 // pred_check_branch
      %125 = sbr.rel (0) target = $region77
    $region76: #{tpu_custom_call.1} parent=1 // pred_region
      %126 = dma.done [#allocation12], 24576
    $region77: #{tpu_custom_call.1} parent=1 // pred_fallthru
      _
    // Predicated region
    $region78: #{tpu_custom_call.1} parent=1 // pred_check
      _
    $region79: #{tpu_custom_call.1} parent=1 // pred_check_branch
      %128 = sbr.rel (0) target = $region81
    $region80: #{tpu_custom_call.1} parent=1 // pred_region
      %129 = dma.done [#allocation12], 128
    $region81: #{tpu_custom_call.1} parent=1 // pred_fallthru
      _
    %v131 = vld [vmem:[#allocation2] sm:$0x3]
    %v132 = vpack.c.bf16 %v131, %v131
    %v133 = vld [vmem:[%s1] sm:$0xff]
    %v134 = vld [vmem:[%s1 + $0x8] sm:$0xf]
    %v135 = vld [vmem:[%s1 + $0xc] sm:$0xff]
    %v136 = vld [vmem:[%s1 + $0x14] sm:$0xf]
    %v137 = vld [vmem:[%s1 + $0x18] sm:$0xff]
    %v138 = vld [vmem:[%s1 + $0x20] sm:$0xf]
    %v139 = vld [vmem:[%s1 + $0x24] sm:$0xff]
    %v140 = vld [vmem:[%s1 + $0x2c] sm:$0xf]
    %v141 = vld [vmem:[%s1 + $0x30] sm:$0xff]
    %v142 = vld [vmem:[%s1 + $0x38] sm:$0xf]
    %v143 = vld [vmem:[%s1 + $0x3c] sm:$0xff]
    %v144 = vld [vmem:[%s1 + $0x44] sm:$0xf]
    %v145 = vld [vmem:[%s1 + $0x48] sm:$0xff]
    %v146 = vld [vmem:[%s1 + $0x50] sm:$0xf]
    %v147 = vld [vmem:[%s1 + $0x54] sm:$0xff]
    %v148 = vld [vmem:[%s1 + $0x5c] sm:$0xf]
    %v149 = vld [vmem:[%s1 + $0x60] sm:$0xff]
    %v150 = vld [vmem:[%s1 + $0x68] sm:$0xf]
    %v151 = vld [vmem:[%s1 + $0x6c] sm:$0xff]
    %v152 = vld [vmem:[%s1 + $0x74] sm:$0xf]
    %v153 = vld [vmem:[%s1 + $0x78] sm:$0xff]
    %v154 = vld [vmem:[%s1 + $0x80] sm:$0xf]
    %v155 = vld [vmem:[%s1 + $0x84] sm:$0xff]
    %v156 = vld [vmem:[%s1 + $0x8c] sm:$0xf]
    %v157 = vld [vmem:[%s1 + $0x90] sm:$0xff]
    %v158 = vld [vmem:[%s1 + $0x98] sm:$0xf]
    %v159 = vld [vmem:[%s1 + $0x9c] sm:$0xff]
    %v160 = vld [vmem:[%s1 + $0xa4] sm:$0xf]
    %v161 = vld [vmem:[%s1 + $0xa8] sm:$0xff]
    %v162 = vld [vmem:[%s1 + $0xb0] sm:$0xf]
    %v163 = vld [vmem:[%s1 + $0xb4] sm:$0xff]
    %v164 = vld [vmem:[%s1 + $0xbc] sm:$0xf]
    %v165 = vld [vmem:[#allocation5] sm:$0x7]
    %v167 = vlaneseq
    %v168 = vshrl.u32 %v167, 7
    %v169 = vsub.s32 0, %v168
    %v170 = vrot.slane %v165, %v169
    %v171 = vlaneseq
    %v172 = vshrl.u32 %v171, 7
    %v173 = vsub.s32 1, %v172
    %v174 = vrot.slane %v165, %v173
    %v175 = vlaneseq
    %v176 = vshrl.u32 %v175, 7
    %v177 = vsub.s32 2, %v176
    %v178 = vrot.slane %v165, %v177
    %v214 = vunpack.c.l.b16 %v133
    %v215 = vunpack.c.h.b16 %v133
    %v216 = vunpack.c.l.b16 %v134
    %v217 = vunpack.c.l.b16 %v135
    %v218 = vunpack.c.h.b16 %v135
    %v219 = vunpack.c.l.b16 %v136
    %v220 = vunpack.c.l.b16 %v137
    %v221 = vunpack.c.h.b16 %v137
    %v222 = vunpack.c.l.b16 %v138
    %v223 = vunpack.c.l.b16 %v139
    %v224 = vunpack.c.h.b16 %v139
    %v225 = vunpack.c.l.b16 %v140
    %v226 = vunpack.c.l.b16 %v141
    %v227 = vunpack.c.h.b16 %v141
    %v228 = vunpack.c.l.b16 %v142
    %v229 = vunpack.c.l.b16 %v143
    %v230 = vunpack.c.h.b16 %v143
    %v231 = vunpack.c.l.b16 %v144
    %v232 = vunpack.c.l.b16 %v145
    %v233 = vunpack.c.h.b16 %v145
    %v234 = vunpack.c.l.b16 %v146
    %v235 = vunpack.c.l.b16 %v147
    %v236 = vunpack.c.h.b16 %v147
    %v237 = vunpack.c.l.b16 %v148
    %v238 = vunpack.c.l.b16 %v149
    %v239 = vunpack.c.h.b16 %v149
    %v240 = vunpack.c.l.b16 %v150
    %v241 = vunpack.c.l.b16 %v151
    %v242 = vunpack.c.h.b16 %v151
    %v243 = vunpack.c.l.b16 %v152
    %v244 = vunpack.c.l.b16 %v153
    %v245 = vunpack.c.h.b16 %v153
    %v246 = vunpack.c.l.b16 %v154
    %v247 = vunpack.c.l.b16 %v155
    %v248 = vunpack.c.h.b16 %v155
    %v249 = vunpack.c.l.b16 %v156
    %v250 = vunpack.c.l.b16 %v157
    %v251 = vunpack.c.h.b16 %v157
    %v252 = vunpack.c.l.b16 %v158
    %v253 = vunpack.c.l.b16 %v159
    %v254 = vunpack.c.h.b16 %v159
    %v255 = vunpack.c.l.b16 %v160
    %v256 = vunpack.c.l.b16 %v161
    %v257 = vunpack.c.h.b16 %v161
    %v258 = vunpack.c.l.b16 %v162
    %v259 = vunpack.c.l.b16 %v163
    %v260 = vunpack.c.h.b16 %v163
    %v261 = vunpack.c.l.b16 %v164
    %v262 = vpack.c.b16 %v217, %v214
    %v263 = vpack.c.b16 %v218, %v215
    %v264 = vpack.c.b16 %v219, %v216
    %v265 = vpack.c.b16 %v223, %v220
    %v266 = vpack.c.b16 %v224, %v221
    %v267 = vpack.c.b16 %v225, %v222
    %v268 = vpack.c.b16 %v229, %v226
    %v269 = vpack.c.b16 %v230, %v227
    %v270 = vpack.c.b16 %v231, %v228
    %v271 = vpack.c.b16 %v235, %v232
    %v272 = vpack.c.b16 %v236, %v233
    %v273 = vpack.c.b16 %v237, %v234
    %v274 = vpack.c.b16 %v241, %v238
    %v275 = vpack.c.b16 %v242, %v239
    %v276 = vpack.c.b16 %v243, %v240
    %v277 = vpack.c.b16 %v247, %v244
    %v278 = vpack.c.b16 %v248, %v245
    %v279 = vpack.c.b16 %v249, %v246
    %v280 = vpack.c.b16 %v253, %v250
    %v281 = vpack.c.b16 %v254, %v251
    %v282 = vpack.c.b16 %v255, %v252
    %v283 = vpack.c.b16 %v259, %v256
    %v284 = vpack.c.b16 %v260, %v257
    %v285 = vpack.c.b16 %v261, %v258
    %310 = vmatprep.subr.bf16.mxu0 %v263
    %311 = vmatpush1.bf16.msra.mxu0 %v262
    %312 = vmatprep.subr.bf16.mxu0 %v266
    %313 = vmatpush1.bf16.msra.mxu0 %v265
    %314 = vmatprep.subr.bf16.mxu0 %v269
    %315 = vmatpush1.bf16.msra.mxu0 %v268
    %316 = vmatprep.subr.bf16.mxu0 %v272
    %317 = vmatpush1.bf16.msra.mxu0 %v271
    %318 = vmatprep.subr.bf16.mxu0 %v275
    %319 = vmatpush1.bf16.msra.mxu0 %v274
    %320 = vmatprep.subr.bf16.mxu0 %v278
    %321 = vmatpush1.bf16.msra.mxu0 %v277
    %322 = vmatprep.subr.bf16.mxu0 %v281
    %323 = vmatpush1.bf16.msra.mxu0 %v280
    %324 = vmatprep.subr.bf16.mxu0 %v284
    %325 = vmatpush1.bf16.msra.mxu0 %v283
    %326 = vmatprep.subr.bf16.mxu0 0
    %327 = vmatpush1.bf16.msra.mxu0 0
    %328 = vmatprep.subr.bf16.mxu0 0
    %329 = vmatpush1.bf16.msra.mxu0 0
    %330 = vmatprep.subr.bf16.mxu0 0
    %331 = vmatpush1.bf16.msra.mxu0 0
    %332 = vmatprep.subr.bf16.mxu0 0
    %333 = vmatpush1.bf16.msra.mxu0 0
    %334 = vmatprep.subr.bf16.mxu0 0
    %335 = vmatpush1.bf16.msra.mxu0 0
    %336 = vmatprep.subr.bf16.mxu0 0
    %337 = vmatpush1.bf16.msra.mxu0 0
    %338 = vmatprep.subr.bf16.mxu0 0
    %339 = vmatpush1.bf16.msra.mxu0 0
    %340 = vmatprep.subr.bf16.mxu0 0
    %341 = vmatpush1.bf16.msra.mxu0 0
    %342 = vmatprep.mubr.bf16.mxu0 0
    %343 = vmatmul.mubr.bf16.gmra.mrb[0].mxu0 %v132
    %v344 = vpop.f32.mrb[0].mxu0
    %v345 = vadd.f32 %v170, %v344
    %v346 = vpop.f32.mrb[0].mxu0
    %v347 = vadd.f32 %v174, %v346
    %v348 = vpop.f32.mrb[0].mxu0
    %v349 = vpop.f32.mrb[0].mxu0
    %350 = vdwg.mxu0
    %351 = vmatprep.subr.bf16.mxu0 0
    %352 = vmatpush1.bf16.msra.mxu0 %v264
    %353 = vmatprep.subr.bf16.mxu0 0
    %354 = vmatpush1.bf16.msra.mxu0 %v267
    %355 = vmatprep.subr.bf16.mxu0 0
    %356 = vmatpush1.bf16.msra.mxu0 %v270
    %357 = vmatprep.subr.bf16.mxu0 0
    %358 = vmatpush1.bf16.msra.mxu0 %v273
    %359 = vmatprep.subr.bf16.mxu0 0
    %360 = vmatpush1.bf16.msra.mxu0 %v276
    %361 = vmatprep.subr.bf16.mxu0 0
    %362 = vmatpush1.bf16.msra.mxu0 %v279
    %363 = vmatprep.subr.bf16.mxu0 0
    %364 = vmatpush1.bf16.msra.mxu0 %v282
    %365 = vmatprep.subr.bf16.mxu0 0
    %366 = vmatpush1.bf16.msra.mxu0 %v285
    %367 = vmatprep.subr.bf16.mxu0 0
    %368 = vmatpush1.bf16.msra.mxu0 0
    %369 = vmatprep.subr.bf16.mxu0 0
    %370 = vmatpush1.bf16.msra.mxu0 0
    %371 = vmatprep.subr.bf16.mxu0 0
    %372 = vmatpush1.bf16.msra.mxu0 0
    %373 = vmatprep.subr.bf16.mxu0 0
    %374 = vmatpush1.bf16.msra.mxu0 0
    %375 = vmatprep.subr.bf16.mxu0 0
    %376 = vmatpush1.bf16.msra.mxu0 0
    %377 = vmatprep.subr.bf16.mxu0 0
    %378 = vmatpush1.bf16.msra.mxu0 0
    %379 = vmatprep.subr.bf16.mxu0 0
    %380 = vmatpush1.bf16.msra.mxu0 0
    %381 = vmatprep.subr.bf16.mxu0 0
    %382 = vmatpush1.bf16.msra.mxu0 0
    %383 = vmatprep.mubr.bf16.mxu0 0
    %384 = vmatmul.mubr.bf16.gmra.mrb[0].mxu0 %v132
    %v385 = vpop.f32.mrb[0].mxu0
    %v386 = vadd.f32 %v178, %v385
    %v387 = vpop.f32.mrb[0].mxu0
    %v388 = vpop.f32.mrb[0].mxu0
    %v389 = vpop.f32.mrb[0].mxu0
    %390 = vdwg.mxu0
    %vm391 = vcmp.ge.f32.partialorder %v345, 0.0
    %vm392 = vcmp.ge.f32.partialorder %v347, 0.0
    %vm393 = vcmp.ge.f32.partialorder %v386, 0.0
    %v394 = vmul.f32 %v345, 0.01
    %v395 = vmul.f32 %v347, 0.01
    %v396 = vmul.f32 %v386, 0.01
    %v397 = vsel %vm391, %v345, %v394
    %v398 = vsel %vm392, %v347, %v395
    %v399 = vsel %vm393, %v386, %v396
    %v400 = vpack.c.bf16 %v397, %v397
    %v401 = vpack.c.bf16 %v398, %v398
    %v402 = vpack.c.bf16 %v399, %v399
    %v403 = vld [vmem:[#allocation7] sm:$0xff]
    %v404 = vld [vmem:[#allocation7 + $0x8] sm:$0xf]
    %v405 = vld [vmem:[#allocation7 + $0xc] sm:$0xff]
    %v406 = vld [vmem:[#allocation7 + $0x14] sm:$0xf]
    %v407 = vld [vmem:[#allocation7 + $0x18] sm:$0xff]
    %v408 = vld [vmem:[#allocation7 + $0x20] sm:$0xf]
    %v409 = vld [vmem:[#allocation7 + $0x24] sm:$0xff]
    %v410 = vld [vmem:[#allocation7 + $0x2c] sm:$0xf]
    %v411 = vld [vmem:[#allocation7 + $0x30] sm:$0xff]
    %v412 = vld [vmem:[#allocation7 + $0x38] sm:$0xf]
    %v413 = vld [vmem:[#allocation7 + $0x3c] sm:$0xff]
    %v414 = vld [vmem:[#allocation7 + $0x44] sm:$0xf]
    %v415 = vld [vmem:[#allocation7 + $0x48] sm:$0xff]
    %v416 = vld [vmem:[#allocation7 + $0x50] sm:$0xf]
    %v417 = vld [vmem:[#allocation7 + $0x54] sm:$0xff]
    %v418 = vld [vmem:[#allocation7 + $0x5c] sm:$0xf]
    %v419 = vld [vmem:[#allocation7 + $0x60] sm:$0xff]
    %v420 = vld [vmem:[#allocation7 + $0x68] sm:$0xf]
    %v421 = vld [vmem:[#allocation7 + $0x6c] sm:$0xff]
    %v422 = vld [vmem:[#allocation7 + $0x74] sm:$0xf]
    %v423 = vld [vmem:[#allocation7 + $0x78] sm:$0xff]
    %v424 = vld [vmem:[#allocation7 + $0x80] sm:$0xf]
    %v425 = vld [vmem:[#allocation7 + $0x84] sm:$0xff]
    %v426 = vld [vmem:[#allocation7 + $0x8c] sm:$0xf]
    %v427 = vld [vmem:[#allocation7 + $0x90] sm:$0xff]
    %v428 = vld [vmem:[#allocation7 + $0x98] sm:$0xf]
    %v429 = vld [vmem:[#allocation7 + $0x9c] sm:$0xff]
    %v430 = vld [vmem:[#allocation7 + $0xa4] sm:$0xf]
    %v431 = vld [vmem:[#allocation7 + $0xa8] sm:$0xff]
    %v432 = vld [vmem:[#allocation7 + $0xb0] sm:$0xf]
    %v433 = vld [vmem:[#allocation7 + $0xb4] sm:$0xff]
    %v434 = vld [vmem:[#allocation7 + $0xbc] sm:$0xf]
    %v435 = vld [vmem:[#allocation7 + $0xc0] sm:$0xff]
    %v436 = vld [vmem:[#allocation7 + $0xc8] sm:$0xf]
    %v437 = vld [vmem:[#allocation7 + $0xcc] sm:$0xff]
    %v438 = vld [vmem:[#allocation7 + $0xd4] sm:$0xf]
    %v439 = vld [vmem:[#allocation7 + $0xd8] sm:$0xff]
    %v440 = vld [vmem:[#allocation7 + $0xe0] sm:$0xf]
    %v441 = vld [vmem:[#allocation7 + $0xe4] sm:$0xff]
    %v442 = vld [vmem:[#allocation7 + $0xec] sm:$0xf]
    %v443 = vld [vmem:[#allocation7 + $0xf0] sm:$0xff]
    %v444 = vld [vmem:[#allocation7 + $0xf8] sm:$0xf]
    %v445 = vld [vmem:[#allocation7 + $0xfc] sm:$0xff]
    %v446 = vld [vmem:[#allocation7 + $0x104] sm:$0xf]
    %v447 = vld [vmem:[#allocation7 + $0x108] sm:$0xff]
    %v448 = vld [vmem:[#allocation7 + $0x110] sm:$0xf]
    %v449 = vld [vmem:[#allocation7 + $0x114] sm:$0xff]
    %v450 = vld [vmem:[#allocation7 + $0x11c] sm:$0xf]
    %v451 = vld [vmem:[#allocation7 + $0x120] sm:$0xff]
    %v452 = vld [vmem:[#allocation7 + $0x128] sm:$0xf]
    %v453 = vld [vmem:[#allocation7 + $0x12c] sm:$0xff]
    %v454 = vld [vmem:[#allocation7 + $0x134] sm:$0xf]
    %v455 = vld [vmem:[#allocation7 + $0x138] sm:$0xff]
    %v456 = vld [vmem:[#allocation7 + $0x140] sm:$0xf]
    %v457 = vld [vmem:[#allocation7 + $0x144] sm:$0xff]
    %v458 = vld [vmem:[#allocation7 + $0x14c] sm:$0xf]
    %v459 = vld [vmem:[#allocation7 + $0x150] sm:$0xff]
    %v460 = vld [vmem:[#allocation7 + $0x158] sm:$0xf]
    %v461 = vld [vmem:[#allocation7 + $0x15c] sm:$0xff]
    %v462 = vld [vmem:[#allocation7 + $0x164] sm:$0xf]
    %v463 = vld [vmem:[#allocation7 + $0x168] sm:$0xff]
    %v464 = vld [vmem:[#allocation7 + $0x170] sm:$0xf]
    %v465 = vld [vmem:[#allocation7 + $0x174] sm:$0xff]
    %v466 = vld [vmem:[#allocation7 + $0x17c] sm:$0xf]
    %v467 = vld [vmem:[#allocation7 + $0x180] sm:$0xff]
    %v468 = vld [vmem:[#allocation7 + $0x188] sm:$0xf]
    %v469 = vld [vmem:[#allocation7 + $0x18c] sm:$0xff]
    %v470 = vld [vmem:[#allocation7 + $0x194] sm:$0xf]
    %v471 = vld [vmem:[#allocation7 + $0x198] sm:$0xff]
    %v472 = vld [vmem:[#allocation7 + $0x1a0] sm:$0xf]
    %v473 = vld [vmem:[#allocation7 + $0x1a4] sm:$0xff]
    %v474 = vld [vmem:[#allocation7 + $0x1ac] sm:$0xf]
    %v475 = vld [vmem:[#allocation7 + $0x1b0] sm:$0xff]
    %v476 = vld [vmem:[#allocation7 + $0x1b8] sm:$0xf]
    %v477 = vld [vmem:[#allocation7 + $0x1bc] sm:$0xff]
    %v478 = vld [vmem:[#allocation7 + $0x1c4] sm:$0xf]
    %v479 = vld [vmem:[#allocation7 + $0x1c8] sm:$0xff]
    %v480 = vld [vmem:[#allocation7 + $0x1d0] sm:$0xf]
    %v481 = vld [vmem:[#allocation7 + $0x1d4] sm:$0xff]
    %v482 = vld [vmem:[#allocation7 + $0x1dc] sm:$0xf]
    %v483 = vld [vmem:[#allocation7 + $0x1e0] sm:$0xff]
    %v484 = vld [vmem:[#allocation7 + $0x1e8] sm:$0xf]
    %v485 = vld [vmem:[#allocation7 + $0x1ec] sm:$0xff]
    %v486 = vld [vmem:[#allocation7 + $0x1f4] sm:$0xf]
    %v487 = vld [vmem:[#allocation8] sm:$0x7]
    %v489 = vlaneseq
    %v490 = vshrl.u32 %v489, 7
    %v491 = vsub.s32 0, %v490
    %v492 = vrot.slane %v487, %v491
    %v493 = vlaneseq
    %v494 = vshrl.u32 %v493, 7
    %v495 = vsub.s32 1, %v494
    %v496 = vrot.slane %v487, %v495
    %v497 = vlaneseq
    %v498 = vshrl.u32 %v497, 7
    %v499 = vsub.s32 2, %v498
    %v500 = vrot.slane %v487, %v499
    %v588 = vunpack.c.l.b16 %v403
    %v589 = vunpack.c.h.b16 %v403
    %v590 = vunpack.c.l.b16 %v404
    %v591 = vunpack.c.l.b16 %v405
    %v592 = vunpack.c.h.b16 %v405
    %v593 = vunpack.c.l.b16 %v406
    %v594 = vunpack.c.l.b16 %v407
    %v595 = vunpack.c.h.b16 %v407
    %v596 = vunpack.c.l.b16 %v408
    %v597 = vunpack.c.l.b16 %v409
    %v598 = vunpack.c.h.b16 %v409
    %v599 = vunpack.c.l.b16 %v410
    %v600 = vunpack.c.l.b16 %v411
    %v601 = vunpack.c.h.b16 %v411
    %v602 = vunpack.c.l.b16 %v412
    %v603 = vunpack.c.l.b16 %v413
    %v604 = vunpack.c.h.b16 %v413
    %v605 = vunpack.c.l.b16 %v414
    %v606 = vunpack.c.l.b16 %v415
    %v607 = vunpack.c.h.b16 %v415
    %v608 = vunpack.c.l.b16 %v416
    %v609 = vunpack.c.l.b16 %v417
    %v610 = vunpack.c.h.b16 %v417
    %v611 = vunpack.c.l.b16 %v418
    %v612 = vunpack.c.l.b16 %v419
    %v613 = vunpack.c.h.b16 %v419
    %v614 = vunpack.c.l.b16 %v420
    %v615 = vunpack.c.l.b16 %v421
    %v616 = vunpack.c.h.b16 %v421
    %v617 = vunpack.c.l.b16 %v422
    %v618 = vunpack.c.l.b16 %v423
    %v619 = vunpack.c.h.b16 %v423
    %v620 = vunpack.c.l.b16 %v424
    %v621 = vunpack.c.l.b16 %v425
    %v622 = vunpack.c.h.b16 %v425
    %v623 = vunpack.c.l.b16 %v426
    %v624 = vunpack.c.l.b16 %v427
    %v625 = vunpack.c.h.b16 %v427
    %v626 = vunpack.c.l.b16 %v428
    %v627 = vunpack.c.l.b16 %v429
    %v628 = vunpack.c.h.b16 %v429
    %v629 = vunpack.c.l.b16 %v430
    %v630 = vunpack.c.l.b16 %v431
    %v631 = vunpack.c.h.b16 %v431
    %v632 = vunpack.c.l.b16 %v432
    %v633 = vunpack.c.l.b16 %v433
    %v634 = vunpack.c.h.b16 %v433
    %v635 = vunpack.c.l.b16 %v434
    %v636 = vunpack.c.l.b16 %v435
    %v637 = vunpack.c.h.b16 %v435
    %v638 = vunpack.c.l.b16 %v436
    %v639 = vunpack.c.l.b16 %v437
    %v640 = vunpack.c.h.b16 %v437
    %v641 = vunpack.c.l.b16 %v438
    %v642 = vunpack.c.l.b16 %v439
    %v643 = vunpack.c.h.b16 %v439
    %v644 = vunpack.c.l.b16 %v440
    %v645 = vunpack.c.l.b16 %v441
    %v646 = vunpack.c.h.b16 %v441
    %v647 = vunpack.c.l.b16 %v442
    %v648 = vunpack.c.l.b16 %v443
    %v649 = vunpack.c.h.b16 %v443
    %v650 = vunpack.c.l.b16 %v444
    %v651 = vunpack.c.l.b16 %v445
    %v652 = vunpack.c.h.b16 %v445
    %v653 = vunpack.c.l.b16 %v446
    %v654 = vunpack.c.l.b16 %v447
    %v655 = vunpack.c.h.b16 %v447
    %v656 = vunpack.c.l.b16 %v448
    %v657 = vunpack.c.l.b16 %v449
    %v658 = vunpack.c.h.b16 %v449
    %v659 = vunpack.c.l.b16 %v450
    %v660 = vunpack.c.l.b16 %v451
    %v661 = vunpack.c.h.b16 %v451
    %v662 = vunpack.c.l.b16 %v452
    %v663 = vunpack.c.l.b16 %v453
    %v664 = vunpack.c.h.b16 %v453
    %v665 = vunpack.c.l.b16 %v454
    %v666 = vunpack.c.l.b16 %v455
    %v667 = vunpack.c.h.b16 %v455
    %v668 = vunpack.c.l.b16 %v456
    %v669 = vunpack.c.l.b16 %v457
    %v670 = vunpack.c.h.b16 %v457
    %v671 = vunpack.c.l.b16 %v458
    %v672 = vunpack.c.l.b16 %v459
    %v673 = vunpack.c.h.b16 %v459
    %v674 = vunpack.c.l.b16 %v460
    %v675 = vunpack.c.l.b16 %v461
    %v676 = vunpack.c.h.b16 %v461
    %v677 = vunpack.c.l.b16 %v462
    %v678 = vunpack.c.l.b16 %v463
    %v679 = vunpack.c.h.b16 %v463
    %v680 = vunpack.c.l.b16 %v464
    %v681 = vunpack.c.l.b16 %v465
    %v682 = vunpack.c.h.b16 %v465
    %v683 = vunpack.c.l.b16 %v466
    %v684 = vunpack.c.l.b16 %v467
    %v685 = vunpack.c.h.b16 %v467
    %v686 = vunpack.c.l.b16 %v468
    %v687 = vunpack.c.l.b16 %v469
    %v688 = vunpack.c.h.b16 %v469
    %v689 = vunpack.c.l.b16 %v470
    %v690 = vunpack.c.l.b16 %v471
    %v691 = vunpack.c.h.b16 %v471
    %v692 = vunpack.c.l.b16 %v472
    %v693 = vunpack.c.l.b16 %v473
    %v694 = vunpack.c.h.b16 %v473
    %v695 = vunpack.c.l.b16 %v474
    %v696 = vunpack.c.l.b16 %v475
    %v697 = vunpack.c.h.b16 %v475
    %v698 = vunpack.c.l.b16 %v476
    %v699 = vunpack.c.l.b16 %v477
    %v700 = vunpack.c.h.b16 %v477
    %v701 = vunpack.c.l.b16 %v478
    %v702 = vunpack.c.l.b16 %v479
    %v703 = vunpack.c.h.b16 %v479
    %v704 = vunpack.c.l.b16 %v480
    %v705 = vunpack.c.l.b16 %v481
    %v706 = vunpack.c.h.b16 %v481
    %v707 = vunpack.c.l.b16 %v482
    %v708 = vunpack.c.l.b16 %v483
    %v709 = vunpack.c.h.b16 %v483
    %v710 = vunpack.c.l.b16 %v484
    %v711 = vunpack.c.l.b16 %v485
    %v712 = vunpack.c.h.b16 %v485
    %v713 = vunpack.c.l.b16 %v486
    %v714 = vpack.c.b16 %v591, %v588
    %v715 = vpack.c.b16 %v592, %v589
    %v716 = vpack.c.b16 %v593, %v590
    %v717 = vpack.c.b16 %v597, %v594
    %v718 = vpack.c.b16 %v598, %v595
    %v719 = vpack.c.b16 %v599, %v596
    %v720 = vpack.c.b16 %v603, %v600
    %v721 = vpack.c.b16 %v604, %v601
    %v722 = vpack.c.b16 %v605, %v602
    %v723 = vpack.c.b16 %v609, %v606
    %v724 = vpack.c.b16 %v610, %v607
    %v725 = vpack.c.b16 %v611, %v608
    %v726 = vpack.c.b16 %v615, %v612
    %v727 = vpack.c.b16 %v616, %v613
    %v728 = vpack.c.b16 %v617, %v614
    %v729 = vpack.c.b16 %v621, %v618
    %v730 = vpack.c.b16 %v622, %v619
    %v731 = vpack.c.b16 %v623, %v620
    %v732 = vpack.c.b16 %v627, %v624
    %v733 = vpack.c.b16 %v628, %v625
    %v734 = vpack.c.b16 %v629, %v626
    %v735 = vpack.c.b16 %v633, %v630
    %v736 = vpack.c.b16 %v634, %v631
    %v737 = vpack.c.b16 %v635, %v632
    %v738 = vpack.c.b16 %v639, %v636
    %v739 = vpack.c.b16 %v640, %v637
    %v740 = vpack.c.b16 %v641, %v638
    %v741 = vpack.c.b16 %v645, %v642
    %v742 = vpack.c.b16 %v646, %v643
    %v743 = vpack.c.b16 %v647, %v644
    %v744 = vpack.c.b16 %v651, %v648
    %v745 = vpack.c.b16 %v652, %v649
    %v746 = vpack.c.b16 %v653, %v650
    %v747 = vpack.c.b16 %v657, %v654
    %v748 = vpack.c.b16 %v658, %v655
    %v749 = vpack.c.b16 %v659, %v656
    %v750 = vpack.c.b16 %v663, %v660
    %v751 = vpack.c.b16 %v664, %v661
    %v752 = vpack.c.b16 %v665, %v662
    %v753 = vpack.c.b16 %v669, %v666
    %v754 = vpack.c.b16 %v670, %v667
    %v755 = vpack.c.b16 %v671, %v668
    %v756 = vpack.c.b16 %v675, %v672
    %v757 = vpack.c.b16 %v676, %v673
    %v758 = vpack.c.b16 %v677, %v674
    %v759 = vpack.c.b16 %v681, %v678
    %v760 = vpack.c.b16 %v682, %v679
    %v761 = vpack.c.b16 %v683, %v680
    %v762 = vpack.c.b16 %v687, %v684
    %v763 = vpack.c.b16 %v688, %v685
    %v764 = vpack.c.b16 %v689, %v686
    %v765 = vpack.c.b16 %v693, %v690
    %v766 = vpack.c.b16 %v694, %v691
    %v767 = vpack.c.b16 %v695, %v692
    %v768 = vpack.c.b16 %v699, %v696
    %v769 = vpack.c.b16 %v700, %v697
    %v770 = vpack.c.b16 %v701, %v698
    %v771 = vpack.c.b16 %v705, %v702
    %v772 = vpack.c.b16 %v706, %v703
    %v773 = vpack.c.b16 %v707, %v704
    %v774 = vpack.c.b16 %v711, %v708
    %v775 = vpack.c.b16 %v712, %v709
    %v776 = vpack.c.b16 %v713, %v710
    %vm840 = vcmask 654336
    %v842 = vsel %vm840, %v402, 0
    %844 = vmatprep.subr.bf16.mxu0 %v715
    %845 = vmatpush1.bf16.msra.mxu0 %v714
    %846 = vmatprep.subr.bf16.mxu0 %v718
    %847 = vmatpush1.bf16.msra.mxu0 %v717
    %848 = vmatprep.subr.bf16.mxu0 %v721
    %849 = vmatpush1.bf16.msra.mxu0 %v720
    %850 = vmatprep.subr.bf16.mxu0 %v724
    %851 = vmatpush1.bf16.msra.mxu0 %v723
    %852 = vmatprep.subr.bf16.mxu0 %v727
    %853 = vmatpush1.bf16.msra.mxu0 %v726
    %854 = vmatprep.subr.bf16.mxu0 %v730
    %855 = vmatpush1.bf16.msra.mxu0 %v729
    %856 = vmatprep.subr.bf16.mxu0 %v733
    %857 = vmatpush1.bf16.msra.mxu0 %v732
    %858 = vmatprep.subr.bf16.mxu0 %v736
    %859 = vmatpush1.bf16.msra.mxu0 %v735
    %860 = vmatprep.subr.bf16.mxu0 %v739
    %861 = vmatpush1.bf16.msra.mxu0 %v738
    %862 = vmatprep.subr.bf16.mxu0 %v742
    %863 = vmatpush1.bf16.msra.mxu0 %v741
    %864 = vmatprep.subr.bf16.mxu0 %v745
    %865 = vmatpush1.bf16.msra.mxu0 %v744
    %866 = vmatprep.subr.bf16.mxu0 %v748
    %867 = vmatpush1.bf16.msra.mxu0 %v747
    %868 = vmatprep.subr.bf16.mxu0 %v751
    %869 = vmatpush1.bf16.msra.mxu0 %v750
    %870 = vmatprep.subr.bf16.mxu0 %v754
    %871 = vmatpush1.bf16.msra.mxu0 %v753
    %872 = vmatprep.subr.bf16.mxu0 %v757
    %873 = vmatpush1.bf16.msra.mxu0 %v756
    %874 = vmatprep.subr.bf16.mxu0 %v760
    %875 = vmatpush1.bf16.msra.mxu0 %v759
    %876 = vmatprep.mubr.bf16.mxu0 %v401
    %877 = vmatmul.mubr.bf16.gmra.mrb[0].mxu0 %v400
    %v878 = vpop.f32.mrb[0].mxu0
    %v879 = vadd.f32 %v492, %v878
    %v880 = vpop.f32.mrb[0].mxu0
    %v881 = vadd.f32 %v496, %v880
    %v882 = vpop.f32.mrb[0].mxu0
    %v883 = vpop.f32.mrb[0].mxu0
    %884 = vdwg.mxu0
    %885 = vmatprep.subr.bf16.mxu0 %v763
    %886 = vmatpush1.bf16.msra.mxu0 %v762
    %887 = vmatprep.subr.bf16.mxu0 %v766
    %888 = vmatpush1.bf16.msra.mxu0 %v765
    %889 = vmatprep.subr.bf16.mxu0 %v769
    %890 = vmatpush1.bf16.msra.mxu0 %v768
    %891 = vmatprep.subr.bf16.mxu0 %v772
    %892 = vmatpush1.bf16.msra.mxu0 %v771
    %893 = vmatprep.subr.bf16.mxu0 %v775
    %894 = vmatpush1.bf16.msra.mxu0 %v774
    %895 = vmatprep.subr.bf16.mxu0 0
    %896 = vmatpush1.bf16.msra.mxu0 0
    %897 = vmatprep.subr.bf16.mxu0 0
    %898 = vmatpush1.bf16.msra.mxu0 0
    %899 = vmatprep.subr.bf16.mxu0 0
    %900 = vmatpush1.bf16.msra.mxu0 0
    %901 = vmatprep.subr.bf16.mxu0 0
    %902 = vmatpush1.bf16.msra.mxu0 0
    %903 = vmatprep.subr.bf16.mxu0 0
    %904 = vmatpush1.bf16.msra.mxu0 0
    %905 = vmatprep.subr.bf16.mxu0 0
    %906 = vmatpush1.bf16.msra.mxu0 0
    %907 = vmatprep.subr.bf16.mxu0 0
    %908 = vmatpush1.bf16.msra.mxu0 0
    %909 = vmatprep.subr.bf16.mxu0 0
    %910 = vmatpush1.bf16.msra.mxu0 0
    %911 = vmatprep.subr.bf16.mxu0 0
    %912 = vmatpush1.bf16.msra.mxu0 0
    %913 = vmatprep.subr.bf16.mxu0 0
    %914 = vmatpush1.bf16.msra.mxu0 0
    %915 = vmatprep.subr.bf16.mxu0 0
    %916 = vmatpush1.bf16.msra.mxu0 0
    %917 = vmatprep.mubr.bf16.mxu0 0
    %918 = vmatmul.mubr.bf16.gmra.mrb[0].mxu0 %v842
    %v919 = vpop.f32.mrb[0].mxu0
    %v920 = vadd.f32 %v879, %v919
    %v921 = vpop.f32.mrb[0].mxu0
    %v922 = vadd.f32 %v881, %v921
    %v923 = vpop.f32.mrb[0].mxu0
    %v924 = vpop.f32.mrb[0].mxu0
    %925 = vdwg.mxu0
    %926 = vmatprep.subr.bf16.mxu0 0
    %927 = vmatpush1.bf16.msra.mxu0 %v716
    %928 = vmatprep.subr.bf16.mxu0 0
    %929 = vmatpush1.bf16.msra.mxu0 %v719
    %930 = vmatprep.subr.bf16.mxu0 0
    %931 = vmatpush1.bf16.msra.mxu0 %v722
    %932 = vmatprep.subr.bf16.mxu0 0
    %933 = vmatpush1.bf16.msra.mxu0 %v725
    %934 = vmatprep.subr.bf16.mxu0 0
    %935 = vmatpush1.bf16.msra.mxu0 %v728
    %936 = vmatprep.subr.bf16.mxu0 0
    %937 = vmatpush1.bf16.msra.mxu0 %v731
    %938 = vmatprep.subr.bf16.mxu0 0
    %939 = vmatpush1.bf16.msra.mxu0 %v734
    %940 = vmatprep.subr.bf16.mxu0 0
    %941 = vmatpush1.bf16.msra.mxu0 %v737
    %942 = vmatprep.subr.bf16.mxu0 0
    %943 = vmatpush1.bf16.msra.mxu0 %v740
    %944 = vmatprep.subr.bf16.mxu0 0
    %945 = vmatpush1.bf16.msra.mxu0 %v743
    %946 = vmatprep.subr.bf16.mxu0 0
    %947 = vmatpush1.bf16.msra.mxu0 %v746
    %948 = vmatprep.subr.bf16.mxu0 0
    %949 = vmatpush1.bf16.msra.mxu0 %v749
    %950 = vmatprep.subr.bf16.mxu0 0
    %951 = vmatpush1.bf16.msra.mxu0 %v752
    %952 = vmatprep.subr.bf16.mxu0 0
    %953 = vmatpush1.bf16.msra.mxu0 %v755
    %954 = vmatprep.subr.bf16.mxu0 0
    %955 = vmatpush1.bf16.msra.mxu0 %v758
    %956 = vmatprep.subr.bf16.mxu0 0
    %957 = vmatpush1.bf16.msra.mxu0 %v761
    %958 = vmatprep.mubr.bf16.mxu0 %v401
    %959 = vmatmul.mubr.bf16.gmra.mrb[0].mxu0 %v400
    %v960 = vpop.f32.mrb[0].mxu0
    %v961 = vadd.f32 %v500, %v960
    %v962 = vpop.f32.mrb[0].mxu0
    %v963 = vpop.f32.mrb[0].mxu0
    %v964 = vpop.f32.mrb[0].mxu0
    %965 = vdwg.mxu0
    %966 = vmatprep.subr.bf16.mxu0 0
    %967 = vmatpush1.bf16.msra.mxu0 %v764
    %968 = vmatprep.subr.bf16.mxu0 0
    %969 = vmatpush1.bf16.msra.mxu0 %v767
    %970 = vmatprep.subr.bf16.mxu0 0
    %971 = vmatpush1.bf16.msra.mxu0 %v770
    %972 = vmatprep.subr.bf16.mxu0 0
    %973 = vmatpush1.bf16.msra.mxu0 %v773
    %974 = vmatprep.subr.bf16.mxu0 0
    %975 = vmatpush1.bf16.msra.mxu0 %v776
    %976 = vmatprep.subr.bf16.mxu0 0
    %977 = vmatpush1.bf16.msra.mxu0 0
    %978 = vmatprep.subr.bf16.mxu0 0
    %979 = vmatpush1.bf16.msra.mxu0 0
    %980 = vmatprep.subr.bf16.mxu0 0
    %981 = vmatpush1.bf16.msra.mxu0 0
    %982 = vmatprep.subr.bf16.mxu0 0
    %983 = vmatpush1.bf16.msra.mxu0 0
    %984 = vmatprep.subr.bf16.mxu0 0
    %985 = vmatpush1.bf16.msra.mxu0 0
    %986 = vmatprep.subr.bf16.mxu0 0
    %987 = vmatpush1.bf16.msra.mxu0 0
    %988 = vmatprep.subr.bf16.mxu0 0
    %989 = vmatpush1.bf16.msra.mxu0 0
    %990 = vmatprep.subr.bf16.mxu0 0
    %991 = vmatpush1.bf16.msra.mxu0 0
    %992 = vmatprep.subr.bf16.mxu0 0
    %993 = vmatpush1.bf16.msra.mxu0 0
    %994 = vmatprep.subr.bf16.mxu0 0
    %995 = vmatpush1.bf16.msra.mxu0 0
    %996 = vmatprep.subr.bf16.mxu0 0
    %997 = vmatpush1.bf16.msra.mxu0 0
    %998 = vmatprep.mubr.bf16.mxu0 0
    %999 = vmatmul.mubr.bf16.gmra.mrb[0].mxu0 %v842
    %v1000 = vpop.f32.mrb[0].mxu0
    %v1001 = vadd.f32 %v961, %v1000
    %v1002 = vpop.f32.mrb[0].mxu0
    %v1003 = vpop.f32.mrb[0].mxu0
    %v1004 = vpop.f32.mrb[0].mxu0
    %1005 = vdwg.mxu0
    %vm1006 = vcmp.ge.f32.partialorder %v920, 0.0
    %vm1007 = vcmp.ge.f32.partialorder %v922, 0.0
    %vm1008 = vcmp.ge.f32.partialorder %v1001, 0.0
    %v1009 = vmul.f32 %v920, 0.01
    %v1010 = vmul.f32 %v922, 0.01
    %v1011 = vmul.f32 %v1001, 0.01
    %v1012 = vsel %vm1006, %v920, %v1009
    %v1013 = vsel %vm1007, %v922, %v1010
    %v1014 = vsel %vm1008, %v1001, %v1011
    %v1015 = vld [vmem:[#allocation10] sm:$0x3f]
    %v1017 = vcombine.high %v1015, %v1015
    %v1019 = vunpack.c.l.s4 1983009808
    %v1020 = vunpack.c.0.s8 %v1019
    %v1021 = vlaneseq
    %v1022 = vshrl.u32 %v1021, 7
    %v1023 = vsub.s32 %v1020, %v1022
    %v1024 = vrot.slane %v1015, %v1023
    %v1026 = vunpack.c.l.s4 1983009808
    %v1027 = vunpack.c.0.s8 %v1026
    %v1028 = vlaneseq
    %v1029 = vshrl.u32 %v1028, 7
    %v1030 = vsub.s32 %v1027, %v1029
    %v1031 = vrot.slane %v1017, %v1030
    %v1032 = vcombine.high %v1024, %v1024
    %v1036 = vmul.f32 %v1012, %v1024
    %v1037 = vmul.f32 %v1013, %v1032
    %v1038 = vmul.f32 %v1014, %v1031
    %v1039 = vpack.c.bf16 %v1036, %v1036
    %v1040 = vpack.c.bf16 %v1037, %v1037
    %v1041 = vpack.c.bf16 %v1038, %v1038
    %v1042 = vld [vmem:[#allocation11] sm:$0xff]
    %v1043 = vld [vmem:[#allocation11 + $0x8] sm:$0xff]
    %v1044 = vld [vmem:[#allocation11 + $0x10] sm:$0xff]
    %v1045 = vld [vmem:[#allocation11 + $0x18] sm:$0xff]
    %v1046 = vld [vmem:[#allocation11 + $0x20] sm:$0xff]
    %v1047 = vld [vmem:[#allocation11 + $0x28] sm:$0xff]
    %v1048 = vld [vmem:[#allocation11 + $0x30] sm:$0xff]
    %v1049 = vld [vmem:[#allocation11 + $0x38] sm:$0xff]
    %v1050 = vld [vmem:[#allocation11 + $0x40] sm:$0xff]
    %v1051 = vld [vmem:[#allocation11 + $0x48] sm:$0xff]
    %v1052 = vld [vmem:[#allocation11 + $0x50] sm:$0xff]
    %v1053 = vld [vmem:[#allocation11 + $0x58] sm:$0xff]
    %v1054 = vld [vmem:[#allocation11 + $0x60] sm:$0xff]
    %v1055 = vld [vmem:[#allocation11 + $0x68] sm:$0xff]
    %v1056 = vld [vmem:[#allocation11 + $0x70] sm:$0xff]
    %v1057 = vld [vmem:[#allocation11 + $0x78] sm:$0xff]
    %v1058 = vld [vmem:[#allocation11 + $0x80] sm:$0xff]
    %v1059 = vld [vmem:[#allocation11 + $0x88] sm:$0xff]
    %v1060 = vld [vmem:[#allocation11 + $0x90] sm:$0xff]
    %v1061 = vld [vmem:[#allocation11 + $0x98] sm:$0xff]
    %v1062 = vld [vmem:[#allocation11 + $0xa0] sm:$0xff]
    %v1063 = vld [vmem:[#allocation11 + $0xa8] sm:$0xff]
    %v1064 = vld [vmem:[#allocation11 + $0xb0] sm:$0xff]
    %v1065 = vld [vmem:[#allocation11 + $0xb8] sm:$0xff]
    %v1066 = vld [vmem:[#allocation11 + $0xc0] sm:$0xff]
    %v1067 = vld [vmem:[#allocation11 + $0xc8] sm:$0xff]
    %v1068 = vld [vmem:[#allocation11 + $0xd0] sm:$0xff]
    %v1069 = vld [vmem:[#allocation11 + $0xd8] sm:$0xff]
    %v1070 = vld [vmem:[#allocation11 + $0xe0] sm:$0xff]
    %v1071 = vld [vmem:[#allocation11 + $0xe8] sm:$0xff]
    %v1072 = vld [vmem:[#allocation11 + $0xf0] sm:$0xff]
    %v1073 = vld [vmem:[#allocation11 + $0xf8] sm:$0xff]
    %v1074 = vld [vmem:[#allocation11 + $0x100] sm:$0xff]
    %v1075 = vld [vmem:[#allocation11 + $0x108] sm:$0xff]
    %v1076 = vld [vmem:[#allocation11 + $0x110] sm:$0xff]
    %v1077 = vld [vmem:[#allocation11 + $0x118] sm:$0xff]
    %v1078 = vld [vmem:[#allocation11 + $0x120] sm:$0xff]
    %v1079 = vld [vmem:[#allocation11 + $0x128] sm:$0xff]
    %v1080 = vld [vmem:[#allocation11 + $0x130] sm:$0xff]
    %v1081 = vld [vmem:[#allocation11 + $0x138] sm:$0xff]
    %v1082 = vld [vmem:[#allocation11 + $0x140] sm:$0xff]
    %v1083 = vld [vmem:[#allocation11 + $0x148] sm:$0xff]
    %v1084 = vld [vmem:[#allocation11 + $0x150] sm:$0xff]
    %v1085 = vld [vmem:[#allocation11 + $0x158] sm:$0xff]
    %v1086 = vld [vmem:[#allocation11 + $0x160] sm:$0xff]
    %v1087 = vld [vmem:[#allocation11 + $0x168] sm:$0xff]
    %v1088 = vld [vmem:[#allocation11 + $0x170] sm:$0xff]
    %v1089 = vld [vmem:[#allocation11 + $0x178] sm:$0xff]
    %v1090 = vld [vmem:[#allocation11 + $0x180] sm:$0xff]
    %v1091 = vld [vmem:[#allocation11 + $0x188] sm:$0xff]
    %v1092 = vld [vmem:[#allocation11 + $0x190] sm:$0xff]
    %v1093 = vld [vmem:[#allocation11 + $0x198] sm:$0xff]
    %v1094 = vld [vmem:[#allocation11 + $0x1a0] sm:$0xff]
    %v1095 = vld [vmem:[#allocation11 + $0x1a8] sm:$0xff]
    %v1096 = vld [vmem:[#allocation11 + $0x1b0] sm:$0xff]
    %v1097 = vld [vmem:[#allocation11 + $0x1b8] sm:$0xff]
    %v1098 = vld [vmem:[#allocation11 + $0x1c0] sm:$0xff]
    %v1099 = vld [vmem:[#allocation11 + $0x1c8] sm:$0xff]
    %v1100 = vld [vmem:[#allocation11 + $0x1d0] sm:$0xff]
    %v1101 = vld [vmem:[#allocation11 + $0x1d8] sm:$0xff]
    %v1102 = vld [vmem:[#allocation11 + $0x1e0] sm:$0xff]
    %v1103 = vld [vmem:[#allocation11 + $0x1e8] sm:$0xff]
    %v1104 = vld [vmem:[#allocation11 + $0x1f0] sm:$0xff]
    %v1105 = vld [vmem:[#allocation11 + $0x1f8] sm:$0xff]
    %v1106 = vld [vmem:[#allocation11 + $0x200] sm:$0xff]
    %v1107 = vld [vmem:[#allocation11 + $0x208] sm:$0xff]
    %v1108 = vld [vmem:[#allocation11 + $0x210] sm:$0xff]
    %v1109 = vld [vmem:[#allocation11 + $0x218] sm:$0xff]
    %v1110 = vld [vmem:[#allocation11 + $0x220] sm:$0xff]
    %v1111 = vld [vmem:[#allocation11 + $0x228] sm:$0xff]
    %v1112 = vld [vmem:[#allocation11 + $0x230] sm:$0xff]
    %v1113 = vld [vmem:[#allocation11 + $0x238] sm:$0xff]
    %v1114 = vld [vmem:[#allocation11 + $0x240] sm:$0xff]
    %v1115 = vld [vmem:[#allocation11 + $0x248] sm:$0xff]
    %v1116 = vld [vmem:[#allocation11 + $0x250] sm:$0xff]
    %v1117 = vld [vmem:[#allocation11 + $0x258] sm:$0xff]
    %v1118 = vld [vmem:[#allocation11 + $0x260] sm:$0xff]
    %v1119 = vld [vmem:[#allocation11 + $0x268] sm:$0xff]
    %v1120 = vld [vmem:[#allocation11 + $0x270] sm:$0xff]
    %v1121 = vld [vmem:[#allocation11 + $0x278] sm:$0xff]
    %v1122 = vld [vmem:[#allocation11 + $0x280] sm:$0xff]
    %v1123 = vld [vmem:[#allocation11 + $0x288] sm:$0xff]
    %v1124 = vld [vmem:[#allocation11 + $0x290] sm:$0xff]
    %v1125 = vld [vmem:[#allocation11 + $0x298] sm:$0xff]
    %v1126 = vld [vmem:[#allocation11 + $0x2a0] sm:$0xff]
    %v1127 = vld [vmem:[#allocation11 + $0x2a8] sm:$0xff]
    %v1128 = vld [vmem:[#allocation11 + $0x2b0] sm:$0xff]
    %v1129 = vld [vmem:[#allocation11 + $0x2b8] sm:$0xff]
    %v1130 = vld [vmem:[#allocation11 + $0x2c0] sm:$0xff]
    %v1131 = vld [vmem:[#allocation11 + $0x2c8] sm:$0xff]
    %v1132 = vld [vmem:[#allocation11 + $0x2d0] sm:$0xff]
    %v1133 = vld [vmem:[#allocation11 + $0x2d8] sm:$0xff]
    %v1134 = vld [vmem:[#allocation11 + $0x2e0] sm:$0xff]
    %v1135 = vld [vmem:[#allocation11 + $0x2e8] sm:$0xff]
    %v1136 = vld [vmem:[#allocation11 + $0x2f0] sm:$0xff]
    %v1137 = vld [vmem:[#allocation11 + $0x2f8] sm:$0xff]
    %v1138 = vld [vmem:[#allocation11 + $0x300] sm:$0xff]
    %v1139 = vld [vmem:[#allocation11 + $0x308] sm:$0xff]
    %v1140 = vld [vmem:[#allocation11 + $0x310] sm:$0xff]
    %v1141 = vld [vmem:[#allocation11 + $0x318] sm:$0xff]
    %v1142 = vld [vmem:[#allocation11 + $0x320] sm:$0xff]
    %v1143 = vld [vmem:[#allocation11 + $0x328] sm:$0xff]
    %v1144 = vld [vmem:[#allocation11 + $0x330] sm:$0xff]
    %v1145 = vld [vmem:[#allocation11 + $0x338] sm:$0xff]
    %v1146 = vld [vmem:[#allocation11 + $0x340] sm:$0xff]
    %v1147 = vld [vmem:[#allocation11 + $0x348] sm:$0xff]
    %v1148 = vld [vmem:[#allocation11 + $0x350] sm:$0xff]
    %v1149 = vld [vmem:[#allocation11 + $0x358] sm:$0xff]
    %v1150 = vld [vmem:[#allocation11 + $0x360] sm:$0xff]
    %v1151 = vld [vmem:[#allocation11 + $0x368] sm:$0xff]
    %v1152 = vld [vmem:[#allocation11 + $0x370] sm:$0xff]
    %v1153 = vld [vmem:[#allocation11 + $0x378] sm:$0xff]
    %v1154 = vld [vmem:[#allocation11 + $0x380] sm:$0xff]
    %v1155 = vld [vmem:[#allocation11 + $0x388] sm:$0xff]
    %v1156 = vld [vmem:[#allocation11 + $0x390] sm:$0xff]
    %v1157 = vld [vmem:[#allocation11 + $0x398] sm:$0xff]
    %v1158 = vld [vmem:[#allocation11 + $0x3a0] sm:$0xff]
    %v1159 = vld [vmem:[#allocation11 + $0x3a8] sm:$0xff]
    %v1160 = vld [vmem:[#allocation11 + $0x3b0] sm:$0xff]
    %v1161 = vld [vmem:[#allocation11 + $0x3b8] sm:$0xff]
    %v1162 = vld [vmem:[#allocation11 + $0x3c0] sm:$0xff]
    %v1163 = vld [vmem:[#allocation11 + $0x3c8] sm:$0xff]
    %v1164 = vld [vmem:[#allocation11 + $0x3d0] sm:$0xff]
    %v1165 = vld [vmem:[#allocation11 + $0x3d8] sm:$0xff]
    %v1166 = vld [vmem:[#allocation11 + $0x3e0] sm:$0xff]
    %v1167 = vld [vmem:[#allocation11 + $0x3e8] sm:$0xff]
    %v1168 = vld [vmem:[#allocation11 + $0x3f0] sm:$0xff]
    %v1169 = vld [vmem:[#allocation11 + $0x3f8] sm:$0xff]
    %v1170 = vld [vmem:[#allocation11 + $0x400] sm:$0xff]
    %v1171 = vld [vmem:[#allocation11 + $0x408] sm:$0xff]
    %v1172 = vld [vmem:[#allocation11 + $0x410] sm:$0xff]
    %v1173 = vld [vmem:[#allocation11 + $0x418] sm:$0xff]
    %v1174 = vld [vmem:[#allocation11 + $0x420] sm:$0xff]
    %v1175 = vld [vmem:[#allocation11 + $0x428] sm:$0xff]
    %v1176 = vld [vmem:[#allocation11 + $0x430] sm:$0xff]
    %v1177 = vld [vmem:[#allocation11 + $0x438] sm:$0xff]
    %v1178 = vld [vmem:[#allocation11 + $0x440] sm:$0xff]
    %v1179 = vld [vmem:[#allocation11 + $0x448] sm:$0xff]
    %v1180 = vld [vmem:[#allocation11 + $0x450] sm:$0xff]
    %v1181 = vld [vmem:[#allocation11 + $0x458] sm:$0xff]
    %v1182 = vld [vmem:[#allocation11 + $0x460] sm:$0xff]
    %v1183 = vld [vmem:[#allocation11 + $0x468] sm:$0xff]
    %v1184 = vld [vmem:[#allocation11 + $0x470] sm:$0xff]
    %v1185 = vld [vmem:[#allocation11 + $0x478] sm:$0xff]
    %v1186 = vld [vmem:[#allocation11 + $0x480] sm:$0xff]
    %v1187 = vld [vmem:[#allocation11 + $0x488] sm:$0xff]
    %v1188 = vld [vmem:[#allocation11 + $0x490] sm:$0xff]
    %v1189 = vld [vmem:[#allocation11 + $0x498] sm:$0xff]
    %v1190 = vld [vmem:[#allocation11 + $0x4a0] sm:$0xff]
    %v1191 = vld [vmem:[#allocation11 + $0x4a8] sm:$0xff]
    %v1192 = vld [vmem:[#allocation11 + $0x4b0] sm:$0xff]
    %v1193 = vld [vmem:[#allocation11 + $0x4b8] sm:$0xff]
    %v1194 = vld [vmem:[#allocation11 + $0x4c0] sm:$0xff]
    %v1195 = vld [vmem:[#allocation11 + $0x4c8] sm:$0xff]
    %v1196 = vld [vmem:[#allocation11 + $0x4d0] sm:$0xff]
    %v1197 = vld [vmem:[#allocation11 + $0x4d8] sm:$0xff]
    %v1198 = vld [vmem:[#allocation11 + $0x4e0] sm:$0xff]
    %v1199 = vld [vmem:[#allocation11 + $0x4e8] sm:$0xff]
    %v1200 = vld [vmem:[#allocation11 + $0x4f0] sm:$0xff]
    %v1201 = vld [vmem:[#allocation11 + $0x4f8] sm:$0xff]
    %v1202 = vld [vmem:[#allocation11 + $0x500] sm:$0xff]
    %v1203 = vld [vmem:[#allocation11 + $0x508] sm:$0xff]
    %v1204 = vld [vmem:[#allocation11 + $0x510] sm:$0xff]
    %v1205 = vld [vmem:[#allocation11 + $0x518] sm:$0xff]
    %v1206 = vld [vmem:[#allocation11 + $0x520] sm:$0xff]
    %v1207 = vld [vmem:[#allocation11 + $0x528] sm:$0xff]
    %v1208 = vld [vmem:[#allocation11 + $0x530] sm:$0xff]
    %v1209 = vld [vmem:[#allocation11 + $0x538] sm:$0xff]
    %v1210 = vld [vmem:[#allocation11 + $0x540] sm:$0xff]
    %v1211 = vld [vmem:[#allocation11 + $0x548] sm:$0xff]
    %v1212 = vld [vmem:[#allocation11 + $0x550] sm:$0xff]
    %v1213 = vld [vmem:[#allocation11 + $0x558] sm:$0xff]
    %v1214 = vld [vmem:[#allocation11 + $0x560] sm:$0xff]
    %v1215 = vld [vmem:[#allocation11 + $0x568] sm:$0xff]
    %v1216 = vld [vmem:[#allocation11 + $0x570] sm:$0xff]
    %v1217 = vld [vmem:[#allocation11 + $0x578] sm:$0xff]
    %v1218 = vld [vmem:[#allocation11 + $0x580] sm:$0xff]
    %v1219 = vld [vmem:[#allocation11 + $0x588] sm:$0xff]
    %v1220 = vld [vmem:[#allocation11 + $0x590] sm:$0xff]
    %v1221 = vld [vmem:[#allocation11 + $0x598] sm:$0xff]
    %v1222 = vld [vmem:[#allocation11 + $0x5a0] sm:$0xff]
    %v1223 = vld [vmem:[#allocation11 + $0x5a8] sm:$0xff]
    %v1224 = vld [vmem:[#allocation11 + $0x5b0] sm:$0xff]
    %v1225 = vld [vmem:[#allocation11 + $0x5b8] sm:$0xff]
    %v1226 = vld [vmem:[#allocation11 + $0x5c0] sm:$0xff]
    %v1227 = vld [vmem:[#allocation11 + $0x5c8] sm:$0xff]
    %v1228 = vld [vmem:[#allocation11 + $0x5d0] sm:$0xff]
    %v1229 = vld [vmem:[#allocation11 + $0x5d8] sm:$0xff]
    %v1230 = vld [vmem:[#allocation11 + $0x5e0] sm:$0xff]
    %v1231 = vld [vmem:[#allocation11 + $0x5e8] sm:$0xff]
    %v1232 = vld [vmem:[#allocation11 + $0x5f0] sm:$0xff]
    %v1233 = vld [vmem:[#allocation11 + $0x5f8] sm:$0xff]
    %v1234 = vld [vmem:[#allocation13] sm:$0xff]
    %v1236 = vlaneseq
    %v1237 = vshrl.u32 %v1236, 7
    %v1238 = vsub.s32 0, %v1237
    %v1239 = vrot.slane %v1234, %v1238
    %v1240 = vlaneseq
    %v1241 = vshrl.u32 %v1240, 7
    %v1242 = vsub.s32 1, %v1241
    %v1243 = vrot.slane %v1234, %v1242
    %v1244 = vlaneseq
    %v1245 = vshrl.u32 %v1244, 7
    %v1246 = vsub.s32 2, %v1245
    %v1247 = vrot.slane %v1234, %v1246
    %v1248 = vlaneseq
    %v1249 = vshrl.u32 %v1248, 7
    %v1250 = vsub.s32 3, %v1249
    %v1251 = vrot.slane %v1234, %v1250
    %v1252 = vlaneseq
    %v1253 = vshrl.u32 %v1252, 7
    %v1254 = vsub.s32 4, %v1253
    %v1255 = vrot.slane %v1234, %v1254
    %v1256 = vlaneseq
    %v1257 = vshrl.u32 %v1256, 7
    %v1258 = vsub.s32 5, %v1257
    %v1259 = vrot.slane %v1234, %v1258
    %v1260 = vlaneseq
    %v1261 = vshrl.u32 %v1260, 7
    %v1262 = vsub.s32 6, %v1261
    %v1263 = vrot.slane %v1234, %v1262
    %v1264 = vlaneseq
    %v1265 = vshrl.u32 %v1264, 7
    %v1266 = vsub.s32 7, %v1265
    %v1267 = vrot.slane %v1234, %v1266
    %v1468 = vunpack.c.l.b16 %v1042
    %v1469 = vunpack.c.h.b16 %v1042
    %v1470 = vunpack.c.l.b16 %v1043
    %v1471 = vunpack.c.h.b16 %v1043
    %v1472 = vunpack.c.l.b16 %v1044
    %v1473 = vunpack.c.h.b16 %v1044
    %v1474 = vunpack.c.l.b16 %v1045
    %v1475 = vunpack.c.h.b16 %v1045
    %v1476 = vunpack.c.l.b16 %v1046
    %v1477 = vunpack.c.h.b16 %v1046
    %v1478 = vunpack.c.l.b16 %v1047
    %v1479 = vunpack.c.h.b16 %v1047
    %v1480 = vunpack.c.l.b16 %v1048
    %v1481 = vunpack.c.h.b16 %v1048
    %v1482 = vunpack.c.l.b16 %v1049
    %v1483 = vunpack.c.h.b16 %v1049
    %v1484 = vunpack.c.l.b16 %v1050
    %v1485 = vunpack.c.h.b16 %v1050
    %v1486 = vunpack.c.l.b16 %v1051
    %v1487 = vunpack.c.h.b16 %v1051
    %v1488 = vunpack.c.l.b16 %v1052
    %v1489 = vunpack.c.h.b16 %v1052
    %v1490 = vunpack.c.l.b16 %v1053
    %v1491 = vunpack.c.h.b16 %v1053
    %v1492 = vunpack.c.l.b16 %v1054
    %v1493 = vunpack.c.h.b16 %v1054
    %v1494 = vunpack.c.l.b16 %v1055
    %v1495 = vunpack.c.h.b16 %v1055
    %v1496 = vunpack.c.l.b16 %v1056
    %v1497 = vunpack.c.h.b16 %v1056
    %v1498 = vunpack.c.l.b16 %v1057
    %v1499 = vunpack.c.h.b16 %v1057
    %v1500 = vunpack.c.l.b16 %v1058
    %v1501 = vunpack.c.h.b16 %v1058
    %v1502 = vunpack.c.l.b16 %v1059
    %v1503 = vunpack.c.h.b16 %v1059
    %v1504 = vunpack.c.l.b16 %v1060
    %v1505 = vunpack.c.h.b16 %v1060
    %v1506 = vunpack.c.l.b16 %v1061
    %v1507 = vunpack.c.h.b16 %v1061
    %v1508 = vunpack.c.l.b16 %v1062
    %v1509 = vunpack.c.h.b16 %v1062
    %v1510 = vunpack.c.l.b16 %v1063
    %v1511 = vunpack.c.h.b16 %v1063
    %v1512 = vunpack.c.l.b16 %v1064
    %v1513 = vunpack.c.h.b16 %v1064
    %v1514 = vunpack.c.l.b16 %v1065
    %v1515 = vunpack.c.h.b16 %v1065
    %v1516 = vunpack.c.l.b16 %v1066
    %v1517 = vunpack.c.h.b16 %v1066
    %v1518 = vunpack.c.l.b16 %v1067
    %v1519 = vunpack.c.h.b16 %v1067
    %v1520 = vunpack.c.l.b16 %v1068
    %v1521 = vunpack.c.h.b16 %v1068
    %v1522 = vunpack.c.l.b16 %v1069
    %v1523 = vunpack.c.h.b16 %v1069
    %v1524 = vunpack.c.l.b16 %v1070
    %v1525 = vunpack.c.h.b16 %v1070
    %v1526 = vunpack.c.l.b16 %v1071
    %v1527 = vunpack.c.h.b16 %v1071
    %v1528 = vunpack.c.l.b16 %v1072
    %v1529 = vunpack.c.h.b16 %v1072
    %v1530 = vunpack.c.l.b16 %v1073
    %v1531 = vunpack.c.h.b16 %v1073
    %v1532 = vunpack.c.l.b16 %v1074
    %v1533 = vunpack.c.h.b16 %v1074
    %v1534 = vunpack.c.l.b16 %v1075
    %v1535 = vunpack.c.h.b16 %v1075
    %v1536 = vunpack.c.l.b16 %v1076
    %v1537 = vunpack.c.h.b16 %v1076
    %v1538 = vunpack.c.l.b16 %v1077
    %v1539 = vunpack.c.h.b16 %v1077
    %v1540 = vunpack.c.l.b16 %v1078
    %v1541 = vunpack.c.h.b16 %v1078
    %v1542 = vunpack.c.l.b16 %v1079
    %v1543 = vunpack.c.h.b16 %v1079
    %v1544 = vunpack.c.l.b16 %v1080
    %v1545 = vunpack.c.h.b16 %v1080
    %v1546 = vunpack.c.l.b16 %v1081
    %v1547 = vunpack.c.h.b16 %v1081
    %v1548 = vunpack.c.l.b16 %v1082
    %v1549 = vunpack.c.h.b16 %v1082
    %v1550 = vunpack.c.l.b16 %v1083
    %v1551 = vunpack.c.h.b16 %v1083
    %v1552 = vunpack.c.l.b16 %v1084
    %v1553 = vunpack.c.h.b16 %v1084
    %v1554 = vunpack.c.l.b16 %v1085
    %v1555 = vunpack.c.h.b16 %v1085
    %v1556 = vunpack.c.l.b16 %v1086
    %v1557 = vunpack.c.h.b16 %v1086
    %v1558 = vunpack.c.l.b16 %v1087
    %v1559 = vunpack.c.h.b16 %v1087
    %v1560 = vunpack.c.l.b16 %v1088
    %v1561 = vunpack.c.h.b16 %v1088
    %v1562 = vunpack.c.l.b16 %v1089
    %v1563 = vunpack.c.h.b16 %v1089
    %v1564 = vunpack.c.l.b16 %v1090
    %v1565 = vunpack.c.h.b16 %v1090
    %v1566 = vunpack.c.l.b16 %v1091
    %v1567 = vunpack.c.h.b16 %v1091
    %v1568 = vunpack.c.l.b16 %v1092
    %v1569 = vunpack.c.h.b16 %v1092
    %v1570 = vunpack.c.l.b16 %v1093
    %v1571 = vunpack.c.h.b16 %v1093
    %v1572 = vunpack.c.l.b16 %v1094
    %v1573 = vunpack.c.h.b16 %v1094
    %v1574 = vunpack.c.l.b16 %v1095
    %v1575 = vunpack.c.h.b16 %v1095
    %v1576 = vunpack.c.l.b16 %v1096
    %v1577 = vunpack.c.h.b16 %v1096
    %v1578 = vunpack.c.l.b16 %v1097
    %v1579 = vunpack.c.h.b16 %v1097
    %v1580 = vunpack.c.l.b16 %v1098
    %v1581 = vunpack.c.h.b16 %v1098
    %v1582 = vunpack.c.l.b16 %v1099
    %v1583 = vunpack.c.h.b16 %v1099
    %v1584 = vunpack.c.l.b16 %v1100
    %v1585 = vunpack.c.h.b16 %v1100
    %v1586 = vunpack.c.l.b16 %v1101
    %v1587 = vunpack.c.h.b16 %v1101
    %v1588 = vunpack.c.l.b16 %v1102
    %v1589 = vunpack.c.h.b16 %v1102
    %v1590 = vunpack.c.l.b16 %v1103
    %v1591 = vunpack.c.h.b16 %v1103
    %v1592 = vunpack.c.l.b16 %v1104
    %v1593 = vunpack.c.h.b16 %v1104
    %v1594 = vunpack.c.l.b16 %v1105
    %v1595 = vunpack.c.h.b16 %v1105
    %v1596 = vunpack.c.l.b16 %v1106
    %v1597 = vunpack.c.h.b16 %v1106
    %v1598 = vunpack.c.l.b16 %v1107
    %v1599 = vunpack.c.h.b16 %v1107
    %v1600 = vunpack.c.l.b16 %v1108
    %v1601 = vunpack.c.h.b16 %v1108
    %v1602 = vunpack.c.l.b16 %v1109
    %v1603 = vunpack.c.h.b16 %v1109
    %v1604 = vunpack.c.l.b16 %v1110
    %v1605 = vunpack.c.h.b16 %v1110
    %v1606 = vunpack.c.l.b16 %v1111
    %v1607 = vunpack.c.h.b16 %v1111
    %v1608 = vunpack.c.l.b16 %v1112
    %v1609 = vunpack.c.h.b16 %v1112
    %v1610 = vunpack.c.l.b16 %v1113
    %v1611 = vunpack.c.h.b16 %v1113
    %v1612 = vunpack.c.l.b16 %v1114
    %v1613 = vunpack.c.h.b16 %v1114
    %v1614 = vunpack.c.l.b16 %v1115
    %v1615 = vunpack.c.h.b16 %v1115
    %v1616 = vunpack.c.l.b16 %v1116
    %v1617 = vunpack.c.h.b16 %v1116
    %v1618 = vunpack.c.l.b16 %v1117
    %v1619 = vunpack.c.h.b16 %v1117
    %v1620 = vunpack.c.l.b16 %v1118
    %v1621 = vunpack.c.h.b16 %v1118
    %v1622 = vunpack.c.l.b16 %v1119
    %v1623 = vunpack.c.h.b16 %v1119
    %v1624 = vunpack.c.l.b16 %v1120
    %v1625 = vunpack.c.h.b16 %v1120
    %v1626 = vunpack.c.l.b16 %v1121
    %v1627 = vunpack.c.h.b16 %v1121
    %v1628 = vunpack.c.l.b16 %v1122
    %v1629 = vunpack.c.h.b16 %v1122
    %v1630 = vunpack.c.l.b16 %v1123
    %v1631 = vunpack.c.h.b16 %v1123
    %v1632 = vunpack.c.l.b16 %v1124
    %v1633 = vunpack.c.h.b16 %v1124
    %v1634 = vunpack.c.l.b16 %v1125
    %v1635 = vunpack.c.h.b16 %v1125
    %v1636 = vunpack.c.l.b16 %v1126
    %v1637 = vunpack.c.h.b16 %v1126
    %v1638 = vunpack.c.l.b16 %v1127
    %v1639 = vunpack.c.h.b16 %v1127
    %v1640 = vunpack.c.l.b16 %v1128
    %v1641 = vunpack.c.h.b16 %v1128
    %v1642 = vunpack.c.l.b16 %v1129
    %v1643 = vunpack.c.h.b16 %v1129
    %v1644 = vunpack.c.l.b16 %v1130
    %v1645 = vunpack.c.h.b16 %v1130
    %v1646 = vunpack.c.l.b16 %v1131
    %v1647 = vunpack.c.h.b16 %v1131
    %v1648 = vunpack.c.l.b16 %v1132
    %v1649 = vunpack.c.h.b16 %v1132
    %v1650 = vunpack.c.l.b16 %v1133
    %v1651 = vunpack.c.h.b16 %v1133
    %v1652 = vunpack.c.l.b16 %v1134
    %v1653 = vunpack.c.h.b16 %v1134
    %v1654 = vunpack.c.l.b16 %v1135
    %v1655 = vunpack.c.h.b16 %v1135
    %v1656 = vunpack.c.l.b16 %v1136
    %v1657 = vunpack.c.h.b16 %v1136
    %v1658 = vunpack.c.l.b16 %v1137
    %v1659 = vunpack.c.h.b16 %v1137
    %v1660 = vunpack.c.l.b16 %v1138
    %v1661 = vunpack.c.h.b16 %v1138
    %v1662 = vunpack.c.l.b16 %v1139
    %v1663 = vunpack.c.h.b16 %v1139
    %v1664 = vunpack.c.l.b16 %v1140
    %v1665 = vunpack.c.h.b16 %v1140
    %v1666 = vunpack.c.l.b16 %v1141
    %v1667 = vunpack.c.h.b16 %v1141
    %v1668 = vunpack.c.l.b16 %v1142
    %v1669 = vunpack.c.h.b16 %v1142
    %v1670 = vunpack.c.l.b16 %v1143
    %v1671 = vunpack.c.h.b16 %v1143
    %v1672 = vunpack.c.l.b16 %v1144
    %v1673 = vunpack.c.h.b16 %v1144
    %v1674 = vunpack.c.l.b16 %v1145
    %v1675 = vunpack.c.h.b16 %v1145
    %v1676 = vunpack.c.l.b16 %v1146
    %v1677 = vunpack.c.h.b16 %v1146
    %v1678 = vunpack.c.l.b16 %v1147
    %v1679 = vunpack.c.h.b16 %v1147
    %v1680 = vunpack.c.l.b16 %v1148
    %v1681 = vunpack.c.h.b16 %v1148
    %v1682 = vunpack.c.l.b16 %v1149
    %v1683 = vunpack.c.h.b16 %v1149
    %v1684 = vunpack.c.l.b16 %v1150
    %v1685 = vunpack.c.h.b16 %v1150
    %v1686 = vunpack.c.l.b16 %v1151
    %v1687 = vunpack.c.h.b16 %v1151
    %v1688 = vunpack.c.l.b16 %v1152
    %v1689 = vunpack.c.h.b16 %v1152
    %v1690 = vunpack.c.l.b16 %v1153
    %v1691 = vunpack.c.h.b16 %v1153
    %v1692 = vunpack.c.l.b16 %v1154
    %v1693 = vunpack.c.h.b16 %v1154
    %v1694 = vunpack.c.l.b16 %v1155
    %v1695 = vunpack.c.h.b16 %v1155
    %v1696 = vunpack.c.l.b16 %v1156
    %v1697 = vunpack.c.h.b16 %v1156
    %v1698 = vunpack.c.l.b16 %v1157
    %v1699 = vunpack.c.h.b16 %v1157
    %v1700 = vunpack.c.l.b16 %v1158
    %v1701 = vunpack.c.h.b16 %v1158
    %v1702 = vunpack.c.l.b16 %v1159
    %v1703 = vunpack.c.h.b16 %v1159
    %v1704 = vunpack.c.l.b16 %v1160
    %v1705 = vunpack.c.h.b16 %v1160
    %v1706 = vunpack.c.l.b16 %v1161
    %v1707 = vunpack.c.h.b16 %v1161
    %v1708 = vunpack.c.l.b16 %v1162
    %v1709 = vunpack.c.h.b16 %v1162
    %v1710 = vunpack.c.l.b16 %v1163
    %v1711 = vunpack.c.h.b16 %v1163
    %v1712 = vunpack.c.l.b16 %v1164
    %v1713 = vunpack.c.h.b16 %v1164
    %v1714 = vunpack.c.l.b16 %v1165
    %v1715 = vunpack.c.h.b16 %v1165
    %v1716 = vunpack.c.l.b16 %v1166
    %v1717 = vunpack.c.h.b16 %v1166
    %v1718 = vunpack.c.l.b16 %v1167
    %v1719 = vunpack.c.h.b16 %v1167
    %v1720 = vunpack.c.l.b16 %v1168
    %v1721 = vunpack.c.h.b16 %v1168
    %v1722 = vunpack.c.l.b16 %v1169
    %v1723 = vunpack.c.h.b16 %v1169
    %v1724 = vunpack.c.l.b16 %v1170
    %v1725 = vunpack.c.h.b16 %v1170
    %v1726 = vunpack.c.l.b16 %v1171
    %v1727 = vunpack.c.h.b16 %v1171
    %v1728 = vunpack.c.l.b16 %v1172
    %v1729 = vunpack.c.h.b16 %v1172
    %v1730 = vunpack.c.l.b16 %v1173
    %v1731 = vunpack.c.h.b16 %v1173
    %v1732 = vunpack.c.l.b16 %v1174
    %v1733 = vunpack.c.h.b16 %v1174
    %v1734 = vunpack.c.l.b16 %v1175
    %v1735 = vunpack.c.h.b16 %v1175
    %v1736 = vunpack.c.l.b16 %v1176
    %v1737 = vunpack.c.h.b16 %v1176
    %v1738 = vunpack.c.l.b16 %v1177
    %v1739 = vunpack.c.h.b16 %v1177
    %v1740 = vunpack.c.l.b16 %v1178
    %v1741 = vunpack.c.h.b16 %v1178
    %v1742 = vunpack.c.l.b16 %v1179
    %v1743 = vunpack.c.h.b16 %v1179
    %v1744 = vunpack.c.l.b16 %v1180
    %v1745 = vunpack.c.h.b16 %v1180
    %v1746 = vunpack.c.l.b16 %v1181
    %v1747 = vunpack.c.h.b16 %v1181
    %v1748 = vunpack.c.l.b16 %v1182
    %v1749 = vunpack.c.h.b16 %v1182
    %v1750 = vunpack.c.l.b16 %v1183
    %v1751 = vunpack.c.h.b16 %v1183
    %v1752 = vunpack.c.l.b16 %v1184
    %v1753 = vunpack.c.h.b16 %v1184
    %v1754 = vunpack.c.l.b16 %v1185
    %v1755 = vunpack.c.h.b16 %v1185
    %v1756 = vunpack.c.l.b16 %v1186
    %v1757 = vunpack.c.h.b16 %v1186
    %v1758 = vunpack.c.l.b16 %v1187
    %v1759 = vunpack.c.h.b16 %v1187
    %v1760 = vunpack.c.l.b16 %v1188
    %v1761 = vunpack.c.h.b16 %v1188
    %v1762 = vunpack.c.l.b16 %v1189
    %v1763 = vunpack.c.h.b16 %v1189
    %v1764 = vunpack.c.l.b16 %v1190
    %v1765 = vunpack.c.h.b16 %v1190
    %v1766 = vunpack.c.l.b16 %v1191
    %v1767 = vunpack.c.h.b16 %v1191
    %v1768 = vunpack.c.l.b16 %v1192
    %v1769 = vunpack.c.h.b16 %v1192
    %v1770 = vunpack.c.l.b16 %v1193
    %v1771 = vunpack.c.h.b16 %v1193
    %v1772 = vunpack.c.l.b16 %v1194
    %v1773 = vunpack.c.h.b16 %v1194
    %v1774 = vunpack.c.l.b16 %v1195
    %v1775 = vunpack.c.h.b16 %v1195
    %v1776 = vunpack.c.l.b16 %v1196
    %v1777 = vunpack.c.h.b16 %v1196
    %v1778 = vunpack.c.l.b16 %v1197
    %v1779 = vunpack.c.h.b16 %v1197
    %v1780 = vunpack.c.l.b16 %v1198
    %v1781 = vunpack.c.h.b16 %v1198
    %v1782 = vunpack.c.l.b16 %v1199
    %v1783 = vunpack.c.h.b16 %v1199
    %v1784 = vunpack.c.l.b16 %v1200
    %v1785 = vunpack.c.h.b16 %v1200
    %v1786 = vunpack.c.l.b16 %v1201
    %v1787 = vunpack.c.h.b16 %v1201
    %v1788 = vunpack.c.l.b16 %v1202
    %v1789 = vunpack.c.h.b16 %v1202
    %v1790 = vunpack.c.l.b16 %v1203
    %v1791 = vunpack.c.h.b16 %v1203
    %v1792 = vunpack.c.l.b16 %v1204
    %v1793 = vunpack.c.h.b16 %v1204
    %v1794 = vunpack.c.l.b16 %v1205
    %v1795 = vunpack.c.h.b16 %v1205
    %v1796 = vunpack.c.l.b16 %v1206
    %v1797 = vunpack.c.h.b16 %v1206
    %v1798 = vunpack.c.l.b16 %v1207
    %v1799 = vunpack.c.h.b16 %v1207
    %v1800 = vunpack.c.l.b16 %v1208
    %v1801 = vunpack.c.h.b16 %v1208
    %v1802 = vunpack.c.l.b16 %v1209
    %v1803 = vunpack.c.h.b16 %v1209
    %v1804 = vunpack.c.l.b16 %v1210
    %v1805 = vunpack.c.h.b16 %v1210
    %v1806 = vunpack.c.l.b16 %v1211
    %v1807 = vunpack.c.h.b16 %v1211
    %v1808 = vunpack.c.l.b16 %v1212
    %v1809 = vunpack.c.h.b16 %v1212
    %v1810 = vunpack.c.l.b16 %v1213
    %v1811 = vunpack.c.h.b16 %v1213
    %v1812 = vunpack.c.l.b16 %v1214
    %v1813 = vunpack.c.h.b16 %v1214
    %v1814 = vunpack.c.l.b16 %v1215
    %v1815 = vunpack.c.h.b16 %v1215
    %v1816 = vunpack.c.l.b16 %v1216
    %v1817 = vunpack.c.h.b16 %v1216
    %v1818 = vunpack.c.l.b16 %v1217
    %v1819 = vunpack.c.h.b16 %v1217
    %v1820 = vunpack.c.l.b16 %v1218
    %v1821 = vunpack.c.h.b16 %v1218
    %v1822 = vunpack.c.l.b16 %v1219
    %v1823 = vunpack.c.h.b16 %v1219
    %v1824 = vunpack.c.l.b16 %v1220
    %v1825 = vunpack.c.h.b16 %v1220
    %v1826 = vunpack.c.l.b16 %v1221
    %v1827 = vunpack.c.h.b16 %v1221
    %v1828 = vunpack.c.l.b16 %v1222
    %v1829 = vunpack.c.h.b16 %v1222
    %v1830 = vunpack.c.l.b16 %v1223
    %v1831 = vunpack.c.h.b16 %v1223
    %v1832 = vunpack.c.l.b16 %v1224
    %v1833 = vunpack.c.h.b16 %v1224
    %v1834 = vunpack.c.l.b16 %v1225
    %v1835 = vunpack.c.h.b16 %v1225
    %v1836 = vunpack.c.l.b16 %v1226
    %v1837 = vunpack.c.h.b16 %v1226
    %v1838 = vunpack.c.l.b16 %v1227
    %v1839 = vunpack.c.h.b16 %v1227
    %v1840 = vunpack.c.l.b16 %v1228
    %v1841 = vunpack.c.h.b16 %v1228
    %v1842 = vunpack.c.l.b16 %v1229
    %v1843 = vunpack.c.h.b16 %v1229
    %v1844 = vunpack.c.l.b16 %v1230
    %v1845 = vunpack.c.h.b16 %v1230
    %v1846 = vunpack.c.l.b16 %v1231
    %v1847 = vunpack.c.h.b16 %v1231
    %v1848 = vunpack.c.l.b16 %v1232
    %v1849 = vunpack.c.h.b16 %v1232
    %v1850 = vunpack.c.l.b16 %v1233
    %v1851 = vunpack.c.h.b16 %v1233
    %v1852 = vpack.c.b16 %v1476, %v1468
    %v1853 = vpack.c.b16 %v1477, %v1469
    %v1854 = vpack.c.b16 %v1478, %v1470
    %v1855 = vpack.c.b16 %v1479, %v1471
    %v1856 = vpack.c.b16 %v1480, %v1472
    %v1857 = vpack.c.b16 %v1481, %v1473
    %v1858 = vpack.c.b16 %v1482, %v1474
    %v1859 = vpack.c.b16 %v1483, %v1475
    %v1860 = vpack.c.b16 %v1492, %v1484
    %v1861 = vpack.c.b16 %v1493, %v1485
    %v1862 = vpack.c.b16 %v1494, %v1486
    %v1863 = vpack.c.b16 %v1495, %v1487
    %v1864 = vpack.c.b16 %v1496, %v1488
    %v1865 = vpack.c.b16 %v1497, %v1489
    %v1866 = vpack.c.b16 %v1498, %v1490
    %v1867 = vpack.c.b16 %v1499, %v1491
    %v1868 = vpack.c.b16 %v1508, %v1500
    %v1869 = vpack.c.b16 %v1509, %v1501
    %v1870 = vpack.c.b16 %v1510, %v1502
    %v1871 = vpack.c.b16 %v1511, %v1503
    %v1872 = vpack.c.b16 %v1512, %v1504
    %v1873 = vpack.c.b16 %v1513, %v1505
    %v1874 = vpack.c.b16 %v1514, %v1506
    %v1875 = vpack.c.b16 %v1515, %v1507
    %v1876 = vpack.c.b16 %v1524, %v1516
    %v1877 = vpack.c.b16 %v1525, %v1517
    %v1878 = vpack.c.b16 %v1526, %v1518
    %v1879 = vpack.c.b16 %v1527, %v1519
    %v1880 = vpack.c.b16 %v1528, %v1520
    %v1881 = vpack.c.b16 %v1529, %v1521
    %v1882 = vpack.c.b16 %v1530, %v1522
    %v1883 = vpack.c.b16 %v1531, %v1523
    %v1884 = vpack.c.b16 %v1540, %v1532
    %v1885 = vpack.c.b16 %v1541, %v1533
    %v1886 = vpack.c.b16 %v1542, %v1534
    %v1887 = vpack.c.b16 %v1543, %v1535
    %v1888 = vpack.c.b16 %v1544, %v1536
    %v1889 = vpack.c.b16 %v1545, %v1537
    %v1890 = vpack.c.b16 %v1546, %v1538
    %v1891 = vpack.c.b16 %v1547, %v1539
    %v1892 = vpack.c.b16 %v1556, %v1548
    %v1893 = vpack.c.b16 %v1557, %v1549
    %v1894 = vpack.c.b16 %v1558, %v1550
    %v1895 = vpack.c.b16 %v1559, %v1551
    %v1896 = vpack.c.b16 %v1560, %v1552
    %v1897 = vpack.c.b16 %v1561, %v1553
    %v1898 = vpack.c.b16 %v1562, %v1554
    %v1899 = vpack.c.b16 %v1563, %v1555
    %v1900 = vpack.c.b16 %v1572, %v1564
    %v1901 = vpack.c.b16 %v1573, %v1565
    %v1902 = vpack.c.b16 %v1574, %v1566
    %v1903 = vpack.c.b16 %v1575, %v1567
    %v1904 = vpack.c.b16 %v1576, %v1568
    %v1905 = vpack.c.b16 %v1577, %v1569
    %v1906 = vpack.c.b16 %v1578, %v1570
    %v1907 = vpack.c.b16 %v1579, %v1571
    %v1908 = vpack.c.b16 %v1588, %v1580
    %v1909 = vpack.c.b16 %v1589, %v1581
    %v1910 = vpack.c.b16 %v1590, %v1582
    %v1911 = vpack.c.b16 %v1591, %v1583
    %v1912 = vpack.c.b16 %v1592, %v1584
    %v1913 = vpack.c.b16 %v1593, %v1585
    %v1914 = vpack.c.b16 %v1594, %v1586
    %v1915 = vpack.c.b16 %v1595, %v1587
    %v1916 = vpack.c.b16 %v1604, %v1596
    %v1917 = vpack.c.b16 %v1605, %v1597
    %v1918 = vpack.c.b16 %v1606, %v1598
    %v1919 = vpack.c.b16 %v1607, %v1599
    %v1920 = vpack.c.b16 %v1608, %v1600
    %v1921 = vpack.c.b16 %v1609, %v1601
    %v1922 = vpack.c.b16 %v1610, %v1602
    %v1923 = vpack.c.b16 %v1611, %v1603
    %v1924 = vpack.c.b16 %v1620, %v1612
    %v1925 = vpack.c.b16 %v1621, %v1613
    %v1926 = vpack.c.b16 %v1622, %v1614
    %v1927 = vpack.c.b16 %v1623, %v1615
    %v1928 = vpack.c.b16 %v1624, %v1616
    %v1929 = vpack.c.b16 %v1625, %v1617
    %v1930 = vpack.c.b16 %v1626, %v1618
    %v1931 = vpack.c.b16 %v1627, %v1619
    %v1932 = vpack.c.b16 %v1636, %v1628
    %v1933 = vpack.c.b16 %v1637, %v1629
    %v1934 = vpack.c.b16 %v1638, %v1630
    %v1935 = vpack.c.b16 %v1639, %v1631
    %v1936 = vpack.c.b16 %v1640, %v1632
    %v1937 = vpack.c.b16 %v1641, %v1633
    %v1938 = vpack.c.b16 %v1642, %v1634
    %v1939 = vpack.c.b16 %v1643, %v1635
    %v1940 = vpack.c.b16 %v1652, %v1644
    %v1941 = vpack.c.b16 %v1653, %v1645
    %v1942 = vpack.c.b16 %v1654, %v1646
    %v1943 = vpack.c.b16 %v1655, %v1647
    %v1944 = vpack.c.b16 %v1656, %v1648
    %v1945 = vpack.c.b16 %v1657, %v1649
    %v1946 = vpack.c.b16 %v1658, %v1650
    %v1947 = vpack.c.b16 %v1659, %v1651
    %v1948 = vpack.c.b16 %v1668, %v1660
    %v1949 = vpack.c.b16 %v1669, %v1661
    %v1950 = vpack.c.b16 %v1670, %v1662
    %v1951 = vpack.c.b16 %v1671, %v1663
    %v1952 = vpack.c.b16 %v1672, %v1664
    %v1953 = vpack.c.b16 %v1673, %v1665
    %v1954 = vpack.c.b16 %v1674, %v1666
    %v1955 = vpack.c.b16 %v1675, %v1667
    %v1956 = vpack.c.b16 %v1684, %v1676
    %v1957 = vpack.c.b16 %v1685, %v1677
    %v1958 = vpack.c.b16 %v1686, %v1678
    %v1959 = vpack.c.b16 %v1687, %v1679
    %v1960 = vpack.c.b16 %v1688, %v1680
    %v1961 = vpack.c.b16 %v1689, %v1681
    %v1962 = vpack.c.b16 %v1690, %v1682
    %v1963 = vpack.c.b16 %v1691, %v1683
    %v1964 = vpack.c.b16 %v1700, %v1692
    %v1965 = vpack.c.b16 %v1701, %v1693
    %v1966 = vpack.c.b16 %v1702, %v1694
    %v1967 = vpack.c.b16 %v1703, %v1695
    %v1968 = vpack.c.b16 %v1704, %v1696
    %v1969 = vpack.c.b16 %v1705, %v1697
    %v1970 = vpack.c.b16 %v1706, %v1698
    %v1971 = vpack.c.b16 %v1707, %v1699
    %v1972 = vpack.c.b16 %v1716, %v1708
    %v1973 = vpack.c.b16 %v1717, %v1709
    %v1974 = vpack.c.b16 %v1718, %v1710
    %v1975 = vpack.c.b16 %v1719, %v1711
    %v1976 = vpack.c.b16 %v1720, %v1712
    %v1977 = vpack.c.b16 %v1721, %v1713
    %v1978 = vpack.c.b16 %v1722, %v1714
    %v1979 = vpack.c.b16 %v1723, %v1715
    %v1980 = vpack.c.b16 %v1732, %v1724
    %v1981 = vpack.c.b16 %v1733, %v1725
    %v1982 = vpack.c.b16 %v1734, %v1726
    %v1983 = vpack.c.b16 %v1735, %v1727
    %v1984 = vpack.c.b16 %v1736, %v1728
    %v1985 = vpack.c.b16 %v1737, %v1729
    %v1986 = vpack.c.b16 %v1738, %v1730
    %v1987 = vpack.c.b16 %v1739, %v1731
    %v1988 = vpack.c.b16 %v1748, %v1740
    %v1989 = vpack.c.b16 %v1749, %v1741
    %v1990 = vpack.c.b16 %v1750, %v1742
    %v1991 = vpack.c.b16 %v1751, %v1743
    %v1992 = vpack.c.b16 %v1752, %v1744
    %v1993 = vpack.c.b16 %v1753, %v1745
    %v1994 = vpack.c.b16 %v1754, %v1746
    %v1995 = vpack.c.b16 %v1755, %v1747
    %v1996 = vpack.c.b16 %v1764, %v1756
    %v1997 = vpack.c.b16 %v1765, %v1757
    %v1998 = vpack.c.b16 %v1766, %v1758
    %v1999 = vpack.c.b16 %v1767, %v1759
    %v2000 = vpack.c.b16 %v1768, %v1760
    %v2001 = vpack.c.b16 %v1769, %v1761
    %v2002 = vpack.c.b16 %v1770, %v1762
    %v2003 = vpack.c.b16 %v1771, %v1763
    %v2004 = vpack.c.b16 %v1780, %v1772
    %v2005 = vpack.c.b16 %v1781, %v1773
    %v2006 = vpack.c.b16 %v1782, %v1774
    %v2007 = vpack.c.b16 %v1783, %v1775
    %v2008 = vpack.c.b16 %v1784, %v1776
    %v2009 = vpack.c.b16 %v1785, %v1777
    %v2010 = vpack.c.b16 %v1786, %v1778
    %v2011 = vpack.c.b16 %v1787, %v1779
    %v2012 = vpack.c.b16 %v1796, %v1788
    %v2013 = vpack.c.b16 %v1797, %v1789
    %v2014 = vpack.c.b16 %v1798, %v1790
    %v2015 = vpack.c.b16 %v1799, %v1791
    %v2016 = vpack.c.b16 %v1800, %v1792
    %v2017 = vpack.c.b16 %v1801, %v1793
    %v2018 = vpack.c.b16 %v1802, %v1794
    %v2019 = vpack.c.b16 %v1803, %v1795
    %v2020 = vpack.c.b16 %v1812, %v1804
    %v2021 = vpack.c.b16 %v1813, %v1805
    %v2022 = vpack.c.b16 %v1814, %v1806
    %v2023 = vpack.c.b16 %v1815, %v1807
    %v2024 = vpack.c.b16 %v1816, %v1808
    %v2025 = vpack.c.b16 %v1817, %v1809
    %v2026 = vpack.c.b16 %v1818, %v1810
    %v2027 = vpack.c.b16 %v1819, %v1811
    %v2028 = vpack.c.b16 %v1828, %v1820
    %v2029 = vpack.c.b16 %v1829, %v1821
    %v2030 = vpack.c.b16 %v1830, %v1822
    %v2031 = vpack.c.b16 %v1831, %v1823
    %v2032 = vpack.c.b16 %v1832, %v1824
    %v2033 = vpack.c.b16 %v1833, %v1825
    %v2034 = vpack.c.b16 %v1834, %v1826
    %v2035 = vpack.c.b16 %v1835, %v1827
    %v2036 = vpack.c.b16 %v1844, %v1836
    %v2037 = vpack.c.b16 %v1845, %v1837
    %v2038 = vpack.c.b16 %v1846, %v1838
    %v2039 = vpack.c.b16 %v1847, %v1839
    %v2040 = vpack.c.b16 %v1848, %v1840
    %v2041 = vpack.c.b16 %v1849, %v1841
    %v2042 = vpack.c.b16 %v1850, %v1842
    %v2043 = vpack.c.b16 %v1851, %v1843
    %2236 = vmatprep.subr.bf16.mxu0 %v1853
    %2237 = vmatpush1.bf16.msra.mxu0 %v1852
    %2238 = vmatprep.subr.bf16.mxu0 %v1861
    %2239 = vmatpush1.bf16.msra.mxu0 %v1860
    %2240 = vmatprep.subr.bf16.mxu0 %v1869
    %2241 = vmatpush1.bf16.msra.mxu0 %v1868
    %2242 = vmatprep.subr.bf16.mxu0 %v1877
    %2243 = vmatpush1.bf16.msra.mxu0 %v1876
    %2244 = vmatprep.subr.bf16.mxu0 %v1885
    %2245 = vmatpush1.bf16.msra.mxu0 %v1884
    %2246 = vmatprep.subr.bf16.mxu0 %v1893
    %2247 = vmatpush1.bf16.msra.mxu0 %v1892
    %2248 = vmatprep.subr.bf16.mxu0 %v1901
    %2249 = vmatpush1.bf16.msra.mxu0 %v1900
    %2250 = vmatprep.subr.bf16.mxu0 %v1909
    %2251 = vmatpush1.bf16.msra.mxu0 %v1908
    %2252 = vmatprep.subr.bf16.mxu0 %v1917
    %2253 = vmatpush1.bf16.msra.mxu0 %v1916
    %2254 = vmatprep.subr.bf16.mxu0 %v1925
    %2255 = vmatpush1.bf16.msra.mxu0 %v1924
    %2256 = vmatprep.subr.bf16.mxu0 %v1933
    %2257 = vmatpush1.bf16.msra.mxu0 %v1932
    %2258 = vmatprep.subr.bf16.mxu0 %v1941
    %2259 = vmatpush1.bf16.msra.mxu0 %v1940
    %2260 = vmatprep.subr.bf16.mxu0 %v1949
    %2261 = vmatpush1.bf16.msra.mxu0 %v1948
    %2262 = vmatprep.subr.bf16.mxu0 %v1957
    %2263 = vmatpush1.bf16.msra.mxu0 %v1956
    %2264 = vmatprep.subr.bf16.mxu0 %v1965
    %2265 = vmatpush1.bf16.msra.mxu0 %v1964
    %2266 = vmatprep.subr.bf16.mxu0 %v1973
    %2267 = vmatpush1.bf16.msra.mxu0 %v1972
    %2268 = vmatprep.mubr.bf16.mxu0 %v1040
    %2269 = vmatmul.mubr.bf16.gmra.mrb[0].mxu0 %v1039
    %v2270 = vpop.f32.mrb[0].mxu0
    %v2271 = vadd.f32 %v1239, %v2270
    %v2272 = vpop.f32.mrb[0].mxu0
    %v2273 = vadd.f32 %v1243, %v2272
    %v2274 = vpop.f32.mrb[0].mxu0
    %v2275 = vpop.f32.mrb[0].mxu0
    %2276 = vdwg.mxu0
    %2277 = vmatprep.subr.bf16.mxu0 %v1981
    %2278 = vmatpush1.bf16.msra.mxu0 %v1980
    %2279 = vmatprep.subr.bf16.mxu0 %v1989
    %2280 = vmatpush1.bf16.msra.mxu0 %v1988
    %2281 = vmatprep.subr.bf16.mxu0 %v1997
    %2282 = vmatpush1.bf16.msra.mxu0 %v1996
    %2283 = vmatprep.subr.bf16.mxu0 %v2005
    %2284 = vmatpush1.bf16.msra.mxu0 %v2004
    %2285 = vmatprep.subr.bf16.mxu0 %v2013
    %2286 = vmatpush1.bf16.msra.mxu0 %v2012
    %2287 = vmatprep.subr.bf16.mxu0 %v2021
    %2288 = vmatpush1.bf16.msra.mxu0 %v2020
    %2289 = vmatprep.subr.bf16.mxu0 %v2029
    %2290 = vmatpush1.bf16.msra.mxu0 %v2028
    %2291 = vmatprep.subr.bf16.mxu0 %v2037
    %2292 = vmatpush1.bf16.msra.mxu0 %v2036
    %2293 = vmatprep.subr.bf16.mxu0 0
    %2294 = vmatpush1.bf16.msra.mxu0 0
    %2295 = vmatprep.subr.bf16.mxu0 0
    %2296 = vmatpush1.bf16.msra.mxu0 0
    %2297 = vmatprep.subr.bf16.mxu0 0
    %2298 = vmatpush1.bf16.msra.mxu0 0
    %2299 = vmatprep.subr.bf16.mxu0 0
    %2300 = vmatpush1.bf16.msra.mxu0 0
    %2301 = vmatprep.subr.bf16.mxu0 0
    %2302 = vmatpush1.bf16.msra.mxu0 0
    %2303 = vmatprep.subr.bf16.mxu0 0
    %2304 = vmatpush1.bf16.msra.mxu0 0
    %2305 = vmatprep.subr.bf16.mxu0 0
    %2306 = vmatpush1.bf16.msra.mxu0 0
    %2307 = vmatprep.subr.bf16.mxu0 0
    %2308 = vmatpush1.bf16.msra.mxu0 0
    %2309 = vmatprep.mubr.bf16.mxu0 0
    %2310 = vmatmul.mubr.bf16.gmra.mrb[0].mxu0 %v1041
    %v2311 = vpop.f32.mrb[0].mxu0
    %v2312 = vadd.f32 %v2271, %v2311
    %v2313 = vpop.f32.mrb[0].mxu0
    %v2314 = vadd.f32 %v2273, %v2313
    %v2315 = vpop.f32.mrb[0].mxu0
    %v2316 = vpop.f32.mrb[0].mxu0
    %2317 = vdwg.mxu0
    %2318 = vmatprep.subr.bf16.mxu0 %v1855
    %2319 = vmatpush1.bf16.msra.mxu0 %v1854
    %2320 = vmatprep.subr.bf16.mxu0 %v1863
    %2321 = vmatpush1.bf16.msra.mxu0 %v1862
    %2322 = vmatprep.subr.bf16.mxu0 %v1871
    %2323 = vmatpush1.bf16.msra.mxu0 %v1870
    %2324 = vmatprep.subr.bf16.mxu0 %v1879
    %2325 = vmatpush1.bf16.msra.mxu0 %v1878
    %2326 = vmatprep.subr.bf16.mxu0 %v1887
    %2327 = vmatpush1.bf16.msra.mxu0 %v1886
    %2328 = vmatprep.subr.bf16.mxu0 %v1895
    %2329 = vmatpush1.bf16.msra.mxu0 %v1894
    %2330 = vmatprep.subr.bf16.mxu0 %v1903
    %2331 = vmatpush1.bf16.msra.mxu0 %v1902
    %2332 = vmatprep.subr.bf16.mxu0 %v1911
    %2333 = vmatpush1.bf16.msra.mxu0 %v1910
    %2334 = vmatprep.subr.bf16.mxu0 %v1919
    %2335 = vmatpush1.bf16.msra.mxu0 %v1918
    %2336 = vmatprep.subr.bf16.mxu0 %v1927
    %2337 = vmatpush1.bf16.msra.mxu0 %v1926
    %2338 = vmatprep.subr.bf16.mxu0 %v1935
    %2339 = vmatpush1.bf16.msra.mxu0 %v1934
    %2340 = vmatprep.subr.bf16.mxu0 %v1943
    %2341 = vmatpush1.bf16.msra.mxu0 %v1942
    %2342 = vmatprep.subr.bf16.mxu0 %v1951
    %2343 = vmatpush1.bf16.msra.mxu0 %v1950
    %2344 = vmatprep.subr.bf16.mxu0 %v1959
    %2345 = vmatpush1.bf16.msra.mxu0 %v1958
    %2346 = vmatprep.subr.bf16.mxu0 %v1967
    %2347 = vmatpush1.bf16.msra.mxu0 %v1966
    %2348 = vmatprep.subr.bf16.mxu0 %v1975
    %2349 = vmatpush1.bf16.msra.mxu0 %v1974
    %2350 = vmatprep.mubr.bf16.mxu0 %v1040
    %2351 = vmatmul.mubr.bf16.gmra.mrb[0].mxu0 %v1039
    %v2352 = vpop.f32.mrb[0].mxu0
    %v2353 = vadd.f32 %v1247, %v2352
    %v2354 = vpop.f32.mrb[0].mxu0
    %v2355 = vadd.f32 %v1251, %v2354
    %v2356 = vpop.f32.mrb[0].mxu0
    %v2357 = vpop.f32.mrb[0].mxu0
    %2358 = vdwg.mxu0
    %2359 = vmatprep.subr.bf16.mxu0 %v1983
    %2360 = vmatpush1.bf16.msra.mxu0 %v1982
    %2361 = vmatprep.subr.bf16.mxu0 %v1991
    %2362 = vmatpush1.bf16.msra.mxu0 %v1990
    %2363 = vmatprep.subr.bf16.mxu0 %v1999
    %2364 = vmatpush1.bf16.msra.mxu0 %v1998
    %2365 = vmatprep.subr.bf16.mxu0 %v2007
    %2366 = vmatpush1.bf16.msra.mxu0 %v2006
    %2367 = vmatprep.subr.bf16.mxu0 %v2015
    %2368 = vmatpush1.bf16.msra.mxu0 %v2014
    %2369 = vmatprep.subr.bf16.mxu0 %v2023
    %2370 = vmatpush1.bf16.msra.mxu0 %v2022
    %2371 = vmatprep.subr.bf16.mxu0 %v2031
    %2372 = vmatpush1.bf16.msra.mxu0 %v2030
    %2373 = vmatprep.subr.bf16.mxu0 %v2039
    %2374 = vmatpush1.bf16.msra.mxu0 %v2038
    %2375 = vmatprep.subr.bf16.mxu0 0
    %2376 = vmatpush1.bf16.msra.mxu0 0
    %2377 = vmatprep.subr.bf16.mxu0 0
    %2378 = vmatpush1.bf16.msra.mxu0 0
    %2379 = vmatprep.subr.bf16.mxu0 0
    %2380 = vmatpush1.bf16.msra.mxu0 0
    %2381 = vmatprep.subr.bf16.mxu0 0
    %2382 = vmatpush1.bf16.msra.mxu0 0
    %2383 = vmatprep.subr.bf16.mxu0 0
    %2384 = vmatpush1.bf16.msra.mxu0 0
    %2385 = vmatprep.subr.bf16.mxu0 0
    %2386 = vmatpush1.bf16.msra.mxu0 0
    %2387 = vmatprep.subr.bf16.mxu0 0
    %2388 = vmatpush1.bf16.msra.mxu0 0
    %2389 = vmatprep.subr.bf16.mxu0 0
    %2390 = vmatpush1.bf16.msra.mxu0 0
    %2391 = vmatprep.mubr.bf16.mxu0 0
    %2392 = vmatmul.mubr.bf16.gmra.mrb[0].mxu0 %v1041
    %v2393 = vpop.f32.mrb[0].mxu0
    %v2394 = vadd.f32 %v2353, %v2393
    %v2395 = vpop.f32.mrb[0].mxu0
    %v2396 = vadd.f32 %v2355, %v2395
    %v2397 = vpop.f32.mrb[0].mxu0
    %v2398 = vpop.f32.mrb[0].mxu0
    %2399 = vdwg.mxu0
    %2400 = vmatprep.subr.bf16.mxu0 %v1857
    %2401 = vmatpush1.bf16.msra.mxu0 %v1856
    %2402 = vmatprep.subr.bf16.mxu0 %v1865
    %2403 = vmatpush1.bf16.msra.mxu0 %v1864
    %2404 = vmatprep.subr.bf16.mxu0 %v1873
    %2405 = vmatpush1.bf16.msra.mxu0 %v1872
    %2406 = vmatprep.subr.bf16.mxu0 %v1881
    %2407 = vmatpush1.bf16.msra.mxu0 %v1880
    %2408 = vmatprep.subr.bf16.mxu0 %v1889
    %2409 = vmatpush1.bf16.msra.mxu0 %v1888
    %2410 = vmatprep.subr.bf16.mxu0 %v1897
    %2411 = vmatpush1.bf16.msra.mxu0 %v1896
    %2412 = vmatprep.subr.bf16.mxu0 %v1905
    %2413 = vmatpush1.bf16.msra.mxu0 %v1904
    %2414 = vmatprep.subr.bf16.mxu0 %v1913
    %2415 = vmatpush1.bf16.msra.mxu0 %v1912
    %2416 = vmatprep.subr.bf16.mxu0 %v1921
    %2417 = vmatpush1.bf16.msra.mxu0 %v1920
    %2418 = vmatprep.subr.bf16.mxu0 %v1929
    %2419 = vmatpush1.bf16.msra.mxu0 %v1928
    %2420 = vmatprep.subr.bf16.mxu0 %v1937
    %2421 = vmatpush1.bf16.msra.mxu0 %v1936
    %2422 = vmatprep.subr.bf16.mxu0 %v1945
    %2423 = vmatpush1.bf16.msra.mxu0 %v1944
    %2424 = vmatprep.subr.bf16.mxu0 %v1953
    %2425 = vmatpush1.bf16.msra.mxu0 %v1952
    %2426 = vmatprep.subr.bf16.mxu0 %v1961
    %2427 = vmatpush1.bf16.msra.mxu0 %v1960
    %2428 = vmatprep.subr.bf16.mxu0 %v1969
    %2429 = vmatpush1.bf16.msra.mxu0 %v1968
    %2430 = vmatprep.subr.bf16.mxu0 %v1977
    %2431 = vmatpush1.bf16.msra.mxu0 %v1976
    %2432 = vmatprep.mubr.bf16.mxu0 %v1040
    %2433 = vmatmul.mubr.bf16.gmra.mrb[0].mxu0 %v1039
    %v2434 = vpop.f32.mrb[0].mxu0
    %v2435 = vadd.f32 %v1255, %v2434
    %v2436 = vpop.f32.mrb[0].mxu0
    %v2437 = vadd.f32 %v1259, %v2436
    %v2438 = vpop.f32.mrb[0].mxu0
    %v2439 = vpop.f32.mrb[0].mxu0
    %2440 = vdwg.mxu0
    %2441 = vmatprep.subr.bf16.mxu0 %v1985
    %2442 = vmatpush1.bf16.msra.mxu0 %v1984
    %2443 = vmatprep.subr.bf16.mxu0 %v1993
    %2444 = vmatpush1.bf16.msra.mxu0 %v1992
    %2445 = vmatprep.subr.bf16.mxu0 %v2001
    %2446 = vmatpush1.bf16.msra.mxu0 %v2000
    %2447 = vmatprep.subr.bf16.mxu0 %v2009
    %2448 = vmatpush1.bf16.msra.mxu0 %v2008
    %2449 = vmatprep.subr.bf16.mxu0 %v2017
    %2450 = vmatpush1.bf16.msra.mxu0 %v2016
    %2451 = vmatprep.subr.bf16.mxu0 %v2025
    %2452 = vmatpush1.bf16.msra.mxu0 %v2024
    %2453 = vmatprep.subr.bf16.mxu0 %v2033
    %2454 = vmatpush1.bf16.msra.mxu0 %v2032
    %2455 = vmatprep.subr.bf16.mxu0 %v2041
    %2456 = vmatpush1.bf16.msra.mxu0 %v2040
    %2457 = vmatprep.subr.bf16.mxu0 0
    %2458 = vmatpush1.bf16.msra.mxu0 0
    %2459 = vmatprep.subr.bf16.mxu0 0
    %2460 = vmatpush1.bf16.msra.mxu0 0
    %2461 = vmatprep.subr.bf16.mxu0 0
    %2462 = vmatpush1.bf16.msra.mxu0 0
    %2463 = vmatprep.subr.bf16.mxu0 0
    %2464 = vmatpush1.bf16.msra.mxu0 0
    %2465 = vmatprep.subr.bf16.mxu0 0
    %2466 = vmatpush1.bf16.msra.mxu0 0
    %2467 = vmatprep.subr.bf16.mxu0 0
    %2468 = vmatpush1.bf16.msra.mxu0 0
    %2469 = vmatprep.subr.bf16.mxu0 0
    %2470 = vmatpush1.bf16.msra.mxu0 0
    %2471 = vmatprep.subr.bf16.mxu0 0
    %2472 = vmatpush1.bf16.msra.mxu0 0
    %2473 = vmatprep.mubr.bf16.mxu0 0
    %2474 = vmatmul.mubr.bf16.gmra.mrb[0].mxu0 %v1041
    %v2475 = vpop.f32.mrb[0].mxu0
    %v2476 = vadd.f32 %v2435, %v2475
    %v2477 = vpop.f32.mrb[0].mxu0
    %v2478 = vadd.f32 %v2437, %v2477
    %v2479 = vpop.f32.mrb[0].mxu0
    %v2480 = vpop.f32.mrb[0].mxu0
    %2481 = vdwg.mxu0
    %2482 = vmatprep.subr.bf16.mxu0 %v1859
    %2483 = vmatpush1.bf16.msra.mxu0 %v1858
    %2484 = vmatprep.subr.bf16.mxu0 %v1867
    %2485 = vmatpush1.bf16.msra.mxu0 %v1866
    %2486 = vmatprep.subr.bf16.mxu0 %v1875
    %2487 = vmatpush1.bf16.msra.mxu0 %v1874
    %2488 = vmatprep.subr.bf16.mxu0 %v1883
    %2489 = vmatpush1.bf16.msra.mxu0 %v1882
    %2490 = vmatprep.subr.bf16.mxu0 %v1891
    %2491 = vmatpush1.bf16.msra.mxu0 %v1890
    %2492 = vmatprep.subr.bf16.mxu0 %v1899
    %2493 = vmatpush1.bf16.msra.mxu0 %v1898
    %2494 = vmatprep.subr.bf16.mxu0 %v1907
    %2495 = vmatpush1.bf16.msra.mxu0 %v1906
    %2496 = vmatprep.subr.bf16.mxu0 %v1915
    %2497 = vmatpush1.bf16.msra.mxu0 %v1914
    %2498 = vmatprep.subr.bf16.mxu0 %v1923
    %2499 = vmatpush1.bf16.msra.mxu0 %v1922
    %2500 = vmatprep.subr.bf16.mxu0 %v1931
    %2501 = vmatpush1.bf16.msra.mxu0 %v1930
    %2502 = vmatprep.subr.bf16.mxu0 %v1939
    %2503 = vmatpush1.bf16.msra.mxu0 %v1938
    %2504 = vmatprep.subr.bf16.mxu0 %v1947
    %2505 = vmatpush1.bf16.msra.mxu0 %v1946
    %2506 = vmatprep.subr.bf16.mxu0 %v1955
    %2507 = vmatpush1.bf16.msra.mxu0 %v1954
    %2508 = vmatprep.subr.bf16.mxu0 %v1963
    %2509 = vmatpush1.bf16.msra.mxu0 %v1962
    %2510 = vmatprep.subr.bf16.mxu0 %v1971
    %2511 = vmatpush1.bf16.msra.mxu0 %v1970
    %2512 = vmatprep.subr.bf16.mxu0 %v1979
    %2513 = vmatpush1.bf16.msra.mxu0 %v1978
    %2514 = vmatprep.mubr.bf16.mxu0 %v1040
    %2515 = vmatmul.mubr.bf16.gmra.mrb[0].mxu0 %v1039
    %v2516 = vpop.f32.mrb[0].mxu0
    %v2517 = vadd.f32 %v1263, %v2516
    %v2518 = vpop.f32.mrb[0].mxu0
    %v2519 = vadd.f32 %v1267, %v2518
    %v2520 = vpop.f32.mrb[0].mxu0
    %v2521 = vpop.f32.mrb[0].mxu0
    %2522 = vdwg.mxu0
    %2523 = vmatprep.subr.bf16.mxu0 %v1987
    %2524 = vmatpush1.bf16.msra.mxu0 %v1986
    %2525 = vmatprep.subr.bf16.mxu0 %v1995
    %2526 = vmatpush1.bf16.msra.mxu0 %v1994
    %2527 = vmatprep.subr.bf16.mxu0 %v2003
    %2528 = vmatpush1.bf16.msra.mxu0 %v2002
    %2529 = vmatprep.subr.bf16.mxu0 %v2011
    %2530 = vmatpush1.bf16.msra.mxu0 %v2010
    %2531 = vmatprep.subr.bf16.mxu0 %v2019
    %2532 = vmatpush1.bf16.msra.mxu0 %v2018
    %2533 = vmatprep.subr.bf16.mxu0 %v2027
    %2534 = vmatpush1.bf16.msra.mxu0 %v2026
    %2535 = vmatprep.subr.bf16.mxu0 %v2035
    %2536 = vmatpush1.bf16.msra.mxu0 %v2034
    %2537 = vmatprep.subr.bf16.mxu0 %v2043
    %2538 = vmatpush1.bf16.msra.mxu0 %v2042
    %2539 = vmatprep.subr.bf16.mxu0 0
    %2540 = vmatpush1.bf16.msra.mxu0 0
    %2541 = vmatprep.subr.bf16.mxu0 0
    %2542 = vmatpush1.bf16.msra.mxu0 0
    %2543 = vmatprep.subr.bf16.mxu0 0
    %2544 = vmatpush1.bf16.msra.mxu0 0
    %2545 = vmatprep.subr.bf16.mxu0 0
    %2546 = vmatpush1.bf16.msra.mxu0 0
    %2547 = vmatprep.subr.bf16.mxu0 0
    %2548 = vmatpush1.bf16.msra.mxu0 0
    %2549 = vmatprep.subr.bf16.mxu0 0
    %2550 = vmatpush1.bf16.msra.mxu0 0
    %2551 = vmatprep.subr.bf16.mxu0 0
    %2552 = vmatpush1.bf16.msra.mxu0 0
    %2553 = vmatprep.subr.bf16.mxu0 0
    %2554 = vmatpush1.bf16.msra.mxu0 0
    %2555 = vmatprep.mubr.bf16.mxu0 0
    %2556 = vmatmul.mubr.bf16.gmra.mrb[0].mxu0 %v1041
    %v2557 = vpop.f32.mrb[0].mxu0
    %v2558 = vadd.f32 %v2517, %v2557
    %v2559 = vpop.f32.mrb[0].mxu0
    %v2560 = vadd.f32 %v2519, %v2559
    %v2561 = vpop.f32.mrb[0].mxu0
    %v2562 = vpop.f32.mrb[0].mxu0
    %2563 = vdwg.mxu0
    %vm2564 = vcmp.ge.f32.partialorder %v2312, 0.0
    %vm2565 = vcmp.ge.f32.partialorder %v2314, 0.0
    %vm2566 = vcmp.ge.f32.partialorder %v2394, 0.0
    %vm2567 = vcmp.ge.f32.partialorder %v2396, 0.0
    %vm2568 = vcmp.ge.f32.partialorder %v2476, 0.0
    %vm2569 = vcmp.ge.f32.partialorder %v2478, 0.0
    %vm2570 = vcmp.ge.f32.partialorder %v2558, 0.0
    %vm2571 = vcmp.ge.f32.partialorder %v2560, 0.0
    %v2572 = vmul.f32 %v2312, 0.01
    %v2573 = vmul.f32 %v2314, 0.01
    %v2574 = vmul.f32 %v2394, 0.01
    %v2575 = vmul.f32 %v2396, 0.01
    %v2576 = vmul.f32 %v2476, 0.01
    %v2577 = vmul.f32 %v2478, 0.01
    %v2578 = vmul.f32 %v2558, 0.01
    %v2579 = vmul.f32 %v2560, 0.01
    %v2580 = vsel %vm2564, %v2312, %v2572
    %v2581 = vsel %vm2565, %v2314, %v2573
    %v2582 = vsel %vm2566, %v2394, %v2574
    %v2583 = vsel %vm2567, %v2396, %v2575
    %v2584 = vsel %vm2568, %v2476, %v2576
    %v2585 = vsel %vm2569, %v2478, %v2577
    %v2586 = vsel %vm2570, %v2558, %v2578
    %v2587 = vsel %vm2571, %v2560, %v2579
    %v2588 = vld [vmem:[%s8] sm:$0xff]
    %v2589 = vld [vmem:[%s8 + $0x8] sm:$0xff]
    %v2592 = vcombine.high %v2588, %v2588
    %v2594 = vunpack.c.l.s4 1983009808
    %v2595 = vunpack.c.0.s8 %v2594
    %v2596 = vlaneseq
    %v2597 = vshrl.u32 %v2596, 7
    %v2598 = vsub.s32 %v2595, %v2597
    %v2599 = vrot.slane %v2588, %v2598
    %v2601 = vunpack.c.l.s4 1983009808
    %v2602 = vunpack.c.0.s8 %v2601
    %v2603 = vlaneseq
    %v2604 = vshrl.u32 %v2603, 7
    %v2605 = vsub.s32 %v2602, %v2604
    %v2606 = vrot.slane %v2592, %v2605
    %v2607 = vcombine.high %v2599, %v2599
    %v2608 = vcombine.high %v2606, %v2606
    %v2609 = vcombine.high %v2589, %v2589
    %v2611 = vunpack.c.l.s4 1983009808
    %v2612 = vunpack.c.0.s8 %v2611
    %v2613 = vlaneseq
    %v2614 = vshrl.u32 %v2613, 7
    %v2615 = vsub.s32 %v2612, %v2614
    %v2616 = vrot.slane %v2589, %v2615
    %v2618 = vunpack.c.l.s4 1983009808
    %v2619 = vunpack.c.0.s8 %v2618
    %v2620 = vlaneseq
    %v2621 = vshrl.u32 %v2620, 7
    %v2622 = vsub.s32 %v2619, %v2621
    %v2623 = vrot.slane %v2609, %v2622
    %v2624 = vcombine.high %v2616, %v2616
    %v2625 = vcombine.high %v2623, %v2623
    %v2634 = vmul.f32 %v2580, %v2599
    %v2635 = vmul.f32 %v2581, %v2607
    %v2636 = vmul.f32 %v2582, %v2606
    %v2637 = vmul.f32 %v2583, %v2608
    %v2638 = vmul.f32 %v2584, %v2616
    %v2639 = vmul.f32 %v2585, %v2624
    %v2640 = vmul.f32 %v2586, %v2623
    %v2641 = vmul.f32 %v2587, %v2625
    %v2642 = vpack.c.bf16 %v2634, %v2634
    %v2643 = vpack.c.bf16 %v2635, %v2635
    %v2644 = vpack.c.bf16 %v2636, %v2636
    %v2645 = vpack.c.bf16 %v2637, %v2637
    %v2646 = vpack.c.bf16 %v2638, %v2638
    %v2647 = vpack.c.bf16 %v2639, %v2639
    %v2648 = vpack.c.bf16 %v2640, %v2640
    %v2649 = vpack.c.bf16 %v2641, %v2641
    %v2650 = vld [vmem:[%s9] sm:$0xf]
    %v2651 = vld [vmem:[%s9 + $0x4] sm:$0xf]
    %v2652 = vld [vmem:[%s9 + $0x8] sm:$0xf]
    %v2653 = vld [vmem:[%s9 + $0xc] sm:$0xf]
    %v2654 = vld [vmem:[%s9 + $0x10] sm:$0xf]
    %v2655 = vld [vmem:[%s9 + $0x14] sm:$0xf]
    %v2656 = vld [vmem:[%s9 + $0x18] sm:$0xf]
    %v2657 = vld [vmem:[%s9 + $0x1c] sm:$0xf]
    %v2658 = vld [vmem:[%s9 + $0x20] sm:$0xf]
    %v2659 = vld [vmem:[%s9 + $0x24] sm:$0xf]
    %v2660 = vld [vmem:[%s9 + $0x28] sm:$0xf]
    %v2661 = vld [vmem:[%s9 + $0x2c] sm:$0xf]
    %v2662 = vld [vmem:[%s9 + $0x30] sm:$0xf]
    %v2663 = vld [vmem:[%s9 + $0x34] sm:$0xf]
    %v2664 = vld [vmem:[%s9 + $0x38] sm:$0xf]
    %v2665 = vld [vmem:[%s9 + $0x3c] sm:$0xf]
    %v2666 = vld [vmem:[%s9 + $0x40] sm:$0xf]
    %v2667 = vld [vmem:[%s9 + $0x44] sm:$0xf]
    %v2668 = vld [vmem:[%s9 + $0x48] sm:$0xf]
    %v2669 = vld [vmem:[%s9 + $0x4c] sm:$0xf]
    %v2670 = vld [vmem:[%s9 + $0x50] sm:$0xf]
    %v2671 = vld [vmem:[%s9 + $0x54] sm:$0xf]
    %v2672 = vld [vmem:[%s9 + $0x58] sm:$0xf]
    %v2673 = vld [vmem:[%s9 + $0x5c] sm:$0xf]
    %v2674 = vld [vmem:[%s9 + $0x60] sm:$0xf]
    %v2675 = vld [vmem:[%s9 + $0x64] sm:$0xf]
    %v2676 = vld [vmem:[%s9 + $0x68] sm:$0xf]
    %v2677 = vld [vmem:[%s9 + $0x6c] sm:$0xf]
    %v2678 = vld [vmem:[%s9 + $0x70] sm:$0xf]
    %v2679 = vld [vmem:[%s9 + $0x74] sm:$0xf]
    %v2680 = vld [vmem:[%s9 + $0x78] sm:$0xf]
    %v2681 = vld [vmem:[%s9 + $0x7c] sm:$0xf]
    %v2682 = vld [vmem:[%s9 + $0x80] sm:$0xf]
    %v2683 = vld [vmem:[%s9 + $0x84] sm:$0xf]
    %v2684 = vld [vmem:[%s9 + $0x88] sm:$0xf]
    %v2685 = vld [vmem:[%s9 + $0x8c] sm:$0xf]
    %v2686 = vld [vmem:[%s9 + $0x90] sm:$0xf]
    %v2687 = vld [vmem:[%s9 + $0x94] sm:$0xf]
    %v2688 = vld [vmem:[%s9 + $0x98] sm:$0xf]
    %v2689 = vld [vmem:[%s9 + $0x9c] sm:$0xf]
    %v2690 = vld [vmem:[%s9 + $0xa0] sm:$0xf]
    %v2691 = vld [vmem:[%s9 + $0xa4] sm:$0xf]
    %v2692 = vld [vmem:[%s9 + $0xa8] sm:$0xf]
    %v2693 = vld [vmem:[%s9 + $0xac] sm:$0xf]
    %v2694 = vld [vmem:[%s9 + $0xb0] sm:$0xf]
    %v2695 = vld [vmem:[%s9 + $0xb4] sm:$0xf]
    %v2696 = vld [vmem:[%s9 + $0xb8] sm:$0xf]
    %v2697 = vld [vmem:[%s9 + $0xbc] sm:$0xf]
    %v2698 = vld [vmem:[%s9 + $0xc0] sm:$0xf]
    %v2699 = vld [vmem:[%s9 + $0xc4] sm:$0xf]
    %v2700 = vld [vmem:[%s9 + $0xc8] sm:$0xf]
    %v2701 = vld [vmem:[%s9 + $0xcc] sm:$0xf]
    %v2702 = vld [vmem:[%s9 + $0xd0] sm:$0xf]
    %v2703 = vld [vmem:[%s9 + $0xd4] sm:$0xf]
    %v2704 = vld [vmem:[%s9 + $0xd8] sm:$0xf]
    %v2705 = vld [vmem:[%s9 + $0xdc] sm:$0xf]
    %v2706 = vld [vmem:[%s9 + $0xe0] sm:$0xf]
    %v2707 = vld [vmem:[%s9 + $0xe4] sm:$0xf]
    %v2708 = vld [vmem:[%s9 + $0xe8] sm:$0xf]
    %v2709 = vld [vmem:[%s9 + $0xec] sm:$0xf]
    %v2710 = vld [vmem:[%s9 + $0xf0] sm:$0xf]
    %v2711 = vld [vmem:[%s9 + $0xf4] sm:$0xf]
    %v2712 = vld [vmem:[%s9 + $0xf8] sm:$0xf]
    %v2713 = vld [vmem:[%s9 + $0xfc] sm:$0xf]
    %v2714 = vld [vmem:[%s9 + $0x100] sm:$0xf]
    %v2715 = vld [vmem:[%s9 + $0x104] sm:$0xf]
    %v2716 = vld [vmem:[%s9 + $0x108] sm:$0xf]
    %v2717 = vld [vmem:[%s9 + $0x10c] sm:$0xf]
    %v2718 = vld [vmem:[%s9 + $0x110] sm:$0xf]
    %v2719 = vld [vmem:[%s9 + $0x114] sm:$0xf]
    %v2720 = vld [vmem:[%s9 + $0x118] sm:$0xf]
    %v2721 = vld [vmem:[%s9 + $0x11c] sm:$0xf]
    %v2722 = vld [vmem:[%s9 + $0x120] sm:$0xf]
    %v2723 = vld [vmem:[%s9 + $0x124] sm:$0xf]
    %v2724 = vld [vmem:[%s9 + $0x128] sm:$0xf]
    %v2725 = vld [vmem:[%s9 + $0x12c] sm:$0xf]
    %v2726 = vld [vmem:[%s9 + $0x130] sm:$0xf]
    %v2727 = vld [vmem:[%s9 + $0x134] sm:$0xf]
    %v2728 = vld [vmem:[%s9 + $0x138] sm:$0xf]
    %v2729 = vld [vmem:[%s9 + $0x13c] sm:$0xf]
    %v2730 = vld [vmem:[%s9 + $0x140] sm:$0xf]
    %v2731 = vld [vmem:[%s9 + $0x144] sm:$0xf]
    %v2732 = vld [vmem:[%s9 + $0x148] sm:$0xf]
    %v2733 = vld [vmem:[%s9 + $0x14c] sm:$0xf]
    %v2734 = vld [vmem:[%s9 + $0x150] sm:$0xf]
    %v2735 = vld [vmem:[%s9 + $0x154] sm:$0xf]
    %v2736 = vld [vmem:[%s9 + $0x158] sm:$0xf]
    %v2737 = vld [vmem:[%s9 + $0x15c] sm:$0xf]
    %v2738 = vld [vmem:[%s9 + $0x160] sm:$0xf]
    %v2739 = vld [vmem:[%s9 + $0x164] sm:$0xf]
    %v2740 = vld [vmem:[%s9 + $0x168] sm:$0xf]
    %v2741 = vld [vmem:[%s9 + $0x16c] sm:$0xf]
    %v2742 = vld [vmem:[%s9 + $0x170] sm:$0xf]
    %v2743 = vld [vmem:[%s9 + $0x174] sm:$0xf]
    %v2744 = vld [vmem:[%s9 + $0x178] sm:$0xf]
    %v2745 = vld [vmem:[%s9 + $0x17c] sm:$0xf]
    %v2746 = vld [vmem:[%s9 + $0x180] sm:$0xf]
    %v2747 = vld [vmem:[%s9 + $0x184] sm:$0xf]
    %v2748 = vld [vmem:[%s9 + $0x188] sm:$0xf]
    %v2749 = vld [vmem:[%s9 + $0x18c] sm:$0xf]
    %v2750 = vld [vmem:[%s9 + $0x190] sm:$0xf]
    %v2751 = vld [vmem:[%s9 + $0x194] sm:$0xf]
    %v2752 = vld [vmem:[%s9 + $0x198] sm:$0xf]
    %v2753 = vld [vmem:[%s9 + $0x19c] sm:$0xf]
    %v2754 = vld [vmem:[%s9 + $0x1a0] sm:$0xf]
    %v2755 = vld [vmem:[%s9 + $0x1a4] sm:$0xf]
    %v2756 = vld [vmem:[%s9 + $0x1a8] sm:$0xf]
    %v2757 = vld [vmem:[%s9 + $0x1ac] sm:$0xf]
    %v2758 = vld [vmem:[%s9 + $0x1b0] sm:$0xf]
    %v2759 = vld [vmem:[%s9 + $0x1b4] sm:$0xf]
    %v2760 = vld [vmem:[%s9 + $0x1b8] sm:$0xf]
    %v2761 = vld [vmem:[%s9 + $0x1bc] sm:$0xf]
    %v2762 = vld [vmem:[%s9 + $0x1c0] sm:$0xf]
    %v2763 = vld [vmem:[%s9 + $0x1c4] sm:$0xf]
    %v2764 = vld [vmem:[%s9 + $0x1c8] sm:$0xf]
    %v2765 = vld [vmem:[%s9 + $0x1cc] sm:$0xf]
    %v2766 = vld [vmem:[%s9 + $0x1d0] sm:$0xf]
    %v2767 = vld [vmem:[%s9 + $0x1d4] sm:$0xf]
    %v2768 = vld [vmem:[%s9 + $0x1d8] sm:$0xf]
    %v2769 = vld [vmem:[%s9 + $0x1dc] sm:$0xf]
    %v2770 = vld [vmem:[%s9 + $0x1e0] sm:$0xf]
    %v2771 = vld [vmem:[%s9 + $0x1e4] sm:$0xf]
    %v2772 = vld [vmem:[%s9 + $0x1e8] sm:$0xf]
    %v2773 = vld [vmem:[%s9 + $0x1ec] sm:$0xf]
    %v2774 = vld [vmem:[%s9 + $0x1f0] sm:$0xf]
    %v2775 = vld [vmem:[%s9 + $0x1f4] sm:$0xf]
    %v2776 = vld [vmem:[%s9 + $0x1f8] sm:$0xf]
    %v2777 = vld [vmem:[%s9 + $0x1fc] sm:$0xf]
    %v2778 = vld [vmem:[%s10] sm:$0x1]
    %v2780 = vlaneseq
    %v2781 = vshrl.u32 %v2780, 7
    %v2782 = vsub.s32 0, %v2781
    %v2783 = vrot.slane %v2778, %v2782
    %v2913 = vunpack.c.l.b16 %v2650
    %v2914 = vunpack.c.l.b16 %v2651
    %v2915 = vunpack.c.l.b16 %v2652
    %v2916 = vunpack.c.l.b16 %v2653
    %v2917 = vunpack.c.l.b16 %v2654
    %v2918 = vunpack.c.l.b16 %v2655
    %v2919 = vunpack.c.l.b16 %v2656
    %v2920 = vunpack.c.l.b16 %v2657
    %v2921 = vunpack.c.l.b16 %v2658
    %v2922 = vunpack.c.l.b16 %v2659
    %v2923 = vunpack.c.l.b16 %v2660
    %v2924 = vunpack.c.l.b16 %v2661
    %v2925 = vunpack.c.l.b16 %v2662
    %v2926 = vunpack.c.l.b16 %v2663
    %v2927 = vunpack.c.l.b16 %v2664
    %v2928 = vunpack.c.l.b16 %v2665
    %v2929 = vunpack.c.l.b16 %v2666
    %v2930 = vunpack.c.l.b16 %v2667
    %v2931 = vunpack.c.l.b16 %v2668
    %v2932 = vunpack.c.l.b16 %v2669
    %v2933 = vunpack.c.l.b16 %v2670
    %v2934 = vunpack.c.l.b16 %v2671
    %v2935 = vunpack.c.l.b16 %v2672
    %v2936 = vunpack.c.l.b16 %v2673
    %v2937 = vunpack.c.l.b16 %v2674
    %v2938 = vunpack.c.l.b16 %v2675
    %v2939 = vunpack.c.l.b16 %v2676
    %v2940 = vunpack.c.l.b16 %v2677
    %v2941 = vunpack.c.l.b16 %v2678
    %v2942 = vunpack.c.l.b16 %v2679
    %v2943 = vunpack.c.l.b16 %v2680
    %v2944 = vunpack.c.l.b16 %v2681
    %v2945 = vunpack.c.l.b16 %v2682
    %v2946 = vunpack.c.l.b16 %v2683
    %v2947 = vunpack.c.l.b16 %v2684
    %v2948 = vunpack.c.l.b16 %v2685
    %v2949 = vunpack.c.l.b16 %v2686
    %v2950 = vunpack.c.l.b16 %v2687
    %v2951 = vunpack.c.l.b16 %v2688
    %v2952 = vunpack.c.l.b16 %v2689
    %v2953 = vunpack.c.l.b16 %v2690
    %v2954 = vunpack.c.l.b16 %v2691
    %v2955 = vunpack.c.l.b16 %v2692
    %v2956 = vunpack.c.l.b16 %v2693
    %v2957 = vunpack.c.l.b16 %v2694
    %v2958 = vunpack.c.l.b16 %v2695
    %v2959 = vunpack.c.l.b16 %v2696
    %v2960 = vunpack.c.l.b16 %v2697
    %v2961 = vunpack.c.l.b16 %v2698
    %v2962 = vunpack.c.l.b16 %v2699
    %v2963 = vunpack.c.l.b16 %v2700
    %v2964 = vunpack.c.l.b16 %v2701
    %v2965 = vunpack.c.l.b16 %v2702
    %v2966 = vunpack.c.l.b16 %v2703
    %v2967 = vunpack.c.l.b16 %v2704
    %v2968 = vunpack.c.l.b16 %v2705
    %v2969 = vunpack.c.l.b16 %v2706
    %v2970 = vunpack.c.l.b16 %v2707
    %v2971 = vunpack.c.l.b16 %v2708
    %v2972 = vunpack.c.l.b16 %v2709
    %v2973 = vunpack.c.l.b16 %v2710
    %v2974 = vunpack.c.l.b16 %v2711
    %v2975 = vunpack.c.l.b16 %v2712
    %v2976 = vunpack.c.l.b16 %v2713
    %v2977 = vunpack.c.l.b16 %v2714
    %v2978 = vunpack.c.l.b16 %v2715
    %v2979 = vunpack.c.l.b16 %v2716
    %v2980 = vunpack.c.l.b16 %v2717
    %v2981 = vunpack.c.l.b16 %v2718
    %v2982 = vunpack.c.l.b16 %v2719
    %v2983 = vunpack.c.l.b16 %v2720
    %v2984 = vunpack.c.l.b16 %v2721
    %v2985 = vunpack.c.l.b16 %v2722
    %v2986 = vunpack.c.l.b16 %v2723
    %v2987 = vunpack.c.l.b16 %v2724
    %v2988 = vunpack.c.l.b16 %v2725
    %v2989 = vunpack.c.l.b16 %v2726
    %v2990 = vunpack.c.l.b16 %v2727
    %v2991 = vunpack.c.l.b16 %v2728
    %v2992 = vunpack.c.l.b16 %v2729
    %v2993 = vunpack.c.l.b16 %v2730
    %v2994 = vunpack.c.l.b16 %v2731
    %v2995 = vunpack.c.l.b16 %v2732
    %v2996 = vunpack.c.l.b16 %v2733
    %v2997 = vunpack.c.l.b16 %v2734
    %v2998 = vunpack.c.l.b16 %v2735
    %v2999 = vunpack.c.l.b16 %v2736
    %v3000 = vunpack.c.l.b16 %v2737
    %v3001 = vunpack.c.l.b16 %v2738
    %v3002 = vunpack.c.l.b16 %v2739
    %v3003 = vunpack.c.l.b16 %v2740
    %v3004 = vunpack.c.l.b16 %v2741
    %v3005 = vunpack.c.l.b16 %v2742
    %v3006 = vunpack.c.l.b16 %v2743
    %v3007 = vunpack.c.l.b16 %v2744
    %v3008 = vunpack.c.l.b16 %v2745
    %v3009 = vunpack.c.l.b16 %v2746
    %v3010 = vunpack.c.l.b16 %v2747
    %v3011 = vunpack.c.l.b16 %v2748
    %v3012 = vunpack.c.l.b16 %v2749
    %v3013 = vunpack.c.l.b16 %v2750
    %v3014 = vunpack.c.l.b16 %v2751
    %v3015 = vunpack.c.l.b16 %v2752
    %v3016 = vunpack.c.l.b16 %v2753
    %v3017 = vunpack.c.l.b16 %v2754
    %v3018 = vunpack.c.l.b16 %v2755
    %v3019 = vunpack.c.l.b16 %v2756
    %v3020 = vunpack.c.l.b16 %v2757
    %v3021 = vunpack.c.l.b16 %v2758
    %v3022 = vunpack.c.l.b16 %v2759
    %v3023 = vunpack.c.l.b16 %v2760
    %v3024 = vunpack.c.l.b16 %v2761
    %v3025 = vunpack.c.l.b16 %v2762
    %v3026 = vunpack.c.l.b16 %v2763
    %v3027 = vunpack.c.l.b16 %v2764
    %v3028 = vunpack.c.l.b16 %v2765
    %v3029 = vunpack.c.l.b16 %v2766
    %v3030 = vunpack.c.l.b16 %v2767
    %v3031 = vunpack.c.l.b16 %v2768
    %v3032 = vunpack.c.l.b16 %v2769
    %v3033 = vunpack.c.l.b16 %v2770
    %v3034 = vunpack.c.l.b16 %v2771
    %v3035 = vunpack.c.l.b16 %v2772
    %v3036 = vunpack.c.l.b16 %v2773
    %v3037 = vunpack.c.l.b16 %v2774
    %v3038 = vunpack.c.l.b16 %v2775
    %v3039 = vunpack.c.l.b16 %v2776
    %v3040 = vunpack.c.l.b16 %v2777
    %v3041 = vpack.c.b16 %v2914, %v2913
    %v3042 = vpack.c.b16 %v2916, %v2915
    %v3043 = vpack.c.b16 %v2918, %v2917
    %v3044 = vpack.c.b16 %v2920, %v2919
    %v3045 = vpack.c.b16 %v2922, %v2921
    %v3046 = vpack.c.b16 %v2924, %v2923
    %v3047 = vpack.c.b16 %v2926, %v2925
    %v3048 = vpack.c.b16 %v2928, %v2927
    %v3049 = vpack.c.b16 %v2930, %v2929
    %v3050 = vpack.c.b16 %v2932, %v2931
    %v3051 = vpack.c.b16 %v2934, %v2933
    %v3052 = vpack.c.b16 %v2936, %v2935
    %v3053 = vpack.c.b16 %v2938, %v2937
    %v3054 = vpack.c.b16 %v2940, %v2939
    %v3055 = vpack.c.b16 %v2942, %v2941
    %v3056 = vpack.c.b16 %v2944, %v2943
    %v3057 = vpack.c.b16 %v2946, %v2945
    %v3058 = vpack.c.b16 %v2948, %v2947
    %v3059 = vpack.c.b16 %v2950, %v2949
    %v3060 = vpack.c.b16 %v2952, %v2951
    %v3061 = vpack.c.b16 %v2954, %v2953
    %v3062 = vpack.c.b16 %v2956, %v2955
    %v3063 = vpack.c.b16 %v2958, %v2957
    %v3064 = vpack.c.b16 %v2960, %v2959
    %v3065 = vpack.c.b16 %v2962, %v2961
    %v3066 = vpack.c.b16 %v2964, %v2963
    %v3067 = vpack.c.b16 %v2966, %v2965
    %v3068 = vpack.c.b16 %v2968, %v2967
    %v3069 = vpack.c.b16 %v2970, %v2969
    %v3070 = vpack.c.b16 %v2972, %v2971
    %v3071 = vpack.c.b16 %v2974, %v2973
    %v3072 = vpack.c.b16 %v2976, %v2975
    %v3073 = vpack.c.b16 %v2978, %v2977
    %v3074 = vpack.c.b16 %v2980, %v2979
    %v3075 = vpack.c.b16 %v2982, %v2981
    %v3076 = vpack.c.b16 %v2984, %v2983
    %v3077 = vpack.c.b16 %v2986, %v2985
    %v3078 = vpack.c.b16 %v2988, %v2987
    %v3079 = vpack.c.b16 %v2990, %v2989
    %v3080 = vpack.c.b16 %v2992, %v2991
    %v3081 = vpack.c.b16 %v2994, %v2993
    %v3082 = vpack.c.b16 %v2996, %v2995
    %v3083 = vpack.c.b16 %v2998, %v2997
    %v3084 = vpack.c.b16 %v3000, %v2999
    %v3085 = vpack.c.b16 %v3002, %v3001
    %v3086 = vpack.c.b16 %v3004, %v3003
    %v3087 = vpack.c.b16 %v3006, %v3005
    %v3088 = vpack.c.b16 %v3008, %v3007
    %v3089 = vpack.c.b16 %v3010, %v3009
    %v3090 = vpack.c.b16 %v3012, %v3011
    %v3091 = vpack.c.b16 %v3014, %v3013
    %v3092 = vpack.c.b16 %v3016, %v3015
    %v3093 = vpack.c.b16 %v3018, %v3017
    %v3094 = vpack.c.b16 %v3020, %v3019
    %v3095 = vpack.c.b16 %v3022, %v3021
    %v3096 = vpack.c.b16 %v3024, %v3023
    %v3097 = vpack.c.b16 %v3026, %v3025
    %v3098 = vpack.c.b16 %v3028, %v3027
    %v3099 = vpack.c.b16 %v3030, %v3029
    %v3100 = vpack.c.b16 %v3032, %v3031
    %v3101 = vpack.c.b16 %v3034, %v3033
    %v3102 = vpack.c.b16 %v3036, %v3035
    %v3103 = vpack.c.b16 %v3038, %v3037
    %v3104 = vpack.c.b16 %v3040, %v3039
    %3169 = vmatprep.subr.bf16.mxu0 0
    %3170 = vmatpush1.bf16.msra.mxu0 %v3041
    %3171 = vmatprep.subr.bf16.mxu0 0
    %3172 = vmatpush1.bf16.msra.mxu0 %v3042
    %3173 = vmatprep.subr.bf16.mxu0 0
    %3174 = vmatpush1.bf16.msra.mxu0 %v3043
    %3175 = vmatprep.subr.bf16.mxu0 0
    %3176 = vmatpush1.bf16.msra.mxu0 %v3044
    %3177 = vmatprep.subr.bf16.mxu0 0
    %3178 = vmatpush1.bf16.msra.mxu0 %v3045
    %3179 = vmatprep.subr.bf16.mxu0 0
    %3180 = vmatpush1.bf16.msra.mxu0 %v3046
    %3181 = vmatprep.subr.bf16.mxu0 0
    %3182 = vmatpush1.bf16.msra.mxu0 %v3047
    %3183 = vmatprep.subr.bf16.mxu0 0
    %3184 = vmatpush1.bf16.msra.mxu0 %v3048
    %3185 = vmatprep.subr.bf16.mxu0 0
    %3186 = vmatpush1.bf16.msra.mxu0 %v3049
    %3187 = vmatprep.subr.bf16.mxu0 0
    %3188 = vmatpush1.bf16.msra.mxu0 %v3050
    %3189 = vmatprep.subr.bf16.mxu0 0
    %3190 = vmatpush1.bf16.msra.mxu0 %v3051
    %3191 = vmatprep.subr.bf16.mxu0 0
    %3192 = vmatpush1.bf16.msra.mxu0 %v3052
    %3193 = vmatprep.subr.bf16.mxu0 0
    %3194 = vmatpush1.bf16.msra.mxu0 %v3053
    %3195 = vmatprep.subr.bf16.mxu0 0
    %3196 = vmatpush1.bf16.msra.mxu0 %v3054
    %3197 = vmatprep.subr.bf16.mxu0 0
    %3198 = vmatpush1.bf16.msra.mxu0 %v3055
    %3199 = vmatprep.subr.bf16.mxu0 0
    %3200 = vmatpush1.bf16.msra.mxu0 %v3056
    %3201 = vmatprep.mubr.bf16.mxu0 %v2643
    %3202 = vmatmul.mubr.bf16.gmra.mrb[0].mxu0 %v2642
    %v3203 = vpop.f32.mrb[0].mxu0
    %v3204 = vadd.f32 %v2783, %v3203
    %v3205 = vpop.f32.mrb[0].mxu0
    %v3206 = vpop.f32.mrb[0].mxu0
    %v3207 = vpop.f32.mrb[0].mxu0
    %3208 = vdwg.mxu0
    %3209 = vmatprep.subr.bf16.mxu0 0
    %3210 = vmatpush1.bf16.msra.mxu0 %v3057
    %3211 = vmatprep.subr.bf16.mxu0 0
    %3212 = vmatpush1.bf16.msra.mxu0 %v3058
    %3213 = vmatprep.subr.bf16.mxu0 0
    %3214 = vmatpush1.bf16.msra.mxu0 %v3059
    %3215 = vmatprep.subr.bf16.mxu0 0
    %3216 = vmatpush1.bf16.msra.mxu0 %v3060
    %3217 = vmatprep.subr.bf16.mxu0 0
    %3218 = vmatpush1.bf16.msra.mxu0 %v3061
    %3219 = vmatprep.subr.bf16.mxu0 0
    %3220 = vmatpush1.bf16.msra.mxu0 %v3062
    %3221 = vmatprep.subr.bf16.mxu0 0
    %3222 = vmatpush1.bf16.msra.mxu0 %v3063
    %3223 = vmatprep.subr.bf16.mxu0 0
    %3224 = vmatpush1.bf16.msra.mxu0 %v3064
    %3225 = vmatprep.subr.bf16.mxu0 0
    %3226 = vmatpush1.bf16.msra.mxu0 %v3065
    %3227 = vmatprep.subr.bf16.mxu0 0
    %3228 = vmatpush1.bf16.msra.mxu0 %v3066
    %3229 = vmatprep.subr.bf16.mxu0 0
    %3230 = vmatpush1.bf16.msra.mxu0 %v3067
    %3231 = vmatprep.subr.bf16.mxu0 0
    %3232 = vmatpush1.bf16.msra.mxu0 %v3068
    %3233 = vmatprep.subr.bf16.mxu0 0
    %3234 = vmatpush1.bf16.msra.mxu0 %v3069
    %3235 = vmatprep.subr.bf16.mxu0 0
    %3236 = vmatpush1.bf16.msra.mxu0 %v3070
    %3237 = vmatprep.subr.bf16.mxu0 0
    %3238 = vmatpush1.bf16.msra.mxu0 %v3071
    %3239 = vmatprep.subr.bf16.mxu0 0
    %3240 = vmatpush1.bf16.msra.mxu0 %v3072
    %3241 = vmatprep.mubr.bf16.mxu0 %v2645
    %3242 = vmatmul.mubr.bf16.gmra.mrb[0].mxu0 %v2644
    %v3243 = vpop.f32.mrb[0].mxu0
    %v3244 = vadd.f32 %v3204, %v3243
    %v3245 = vpop.f32.mrb[0].mxu0
    %v3246 = vpop.f32.mrb[0].mxu0
    %v3247 = vpop.f32.mrb[0].mxu0
    %3248 = vdwg.mxu0
    %3249 = vmatprep.subr.bf16.mxu0 0
    %3250 = vmatpush1.bf16.msra.mxu0 %v3073
    %3251 = vmatprep.subr.bf16.mxu0 0
    %3252 = vmatpush1.bf16.msra.mxu0 %v3074
    %3253 = vmatprep.subr.bf16.mxu0 0
    %3254 = vmatpush1.bf16.msra.mxu0 %v3075
    %3255 = vmatprep.subr.bf16.mxu0 0
    %3256 = vmatpush1.bf16.msra.mxu0 %v3076
    %3257 = vmatprep.subr.bf16.mxu0 0
    %3258 = vmatpush1.bf16.msra.mxu0 %v3077
    %3259 = vmatprep.subr.bf16.mxu0 0
    %3260 = vmatpush1.bf16.msra.mxu0 %v3078
    %3261 = vmatprep.subr.bf16.mxu0 0
    %3262 = vmatpush1.bf16.msra.mxu0 %v3079
    %3263 = vmatprep.subr.bf16.mxu0 0
    %3264 = vmatpush1.bf16.msra.mxu0 %v3080
    %3265 = vmatprep.subr.bf16.mxu0 0
    %3266 = vmatpush1.bf16.msra.mxu0 %v3081
    %3267 = vmatprep.subr.bf16.mxu0 0
    %3268 = vmatpush1.bf16.msra.mxu0 %v3082
    %3269 = vmatprep.subr.bf16.mxu0 0
    %3270 = vmatpush1.bf16.msra.mxu0 %v3083
    %3271 = vmatprep.subr.bf16.mxu0 0
    %3272 = vmatpush1.bf16.msra.mxu0 %v3084
    %3273 = vmatprep.subr.bf16.mxu0 0
    %3274 = vmatpush1.bf16.msra.mxu0 %v3085
    %3275 = vmatprep.subr.bf16.mxu0 0
    %3276 = vmatpush1.bf16.msra.mxu0 %v3086
    %3277 = vmatprep.subr.bf16.mxu0 0
    %3278 = vmatpush1.bf16.msra.mxu0 %v3087
    %3279 = vmatprep.subr.bf16.mxu0 0
    %3280 = vmatpush1.bf16.msra.mxu0 %v3088
    %3281 = vmatprep.mubr.bf16.mxu0 %v2647
    %3282 = vmatmul.mubr.bf16.gmra.mrb[0].mxu0 %v2646
    %v3283 = vpop.f32.mrb[0].mxu0
    %v3284 = vadd.f32 %v3244, %v3283
    %v3285 = vpop.f32.mrb[0].mxu0
    %v3286 = vpop.f32.mrb[0].mxu0
    %v3287 = vpop.f32.mrb[0].mxu0
    %3288 = vdwg.mxu0
    %3289 = vmatprep.subr.bf16.mxu0 0
    %3290 = vmatpush1.bf16.msra.mxu0 %v3089
    %3291 = vmatprep.subr.bf16.mxu0 0
    %3292 = vmatpush1.bf16.msra.mxu0 %v3090
    %3293 = vmatprep.subr.bf16.mxu0 0
    %3294 = vmatpush1.bf16.msra.mxu0 %v3091
    %3295 = vmatprep.subr.bf16.mxu0 0
    %3296 = vmatpush1.bf16.msra.mxu0 %v3092
    %3297 = vmatprep.subr.bf16.mxu0 0
    %3298 = vmatpush1.bf16.msra.mxu0 %v3093
    %3299 = vmatprep.subr.bf16.mxu0 0
    %3300 = vmatpush1.bf16.msra.mxu0 %v3094
    %3301 = vmatprep.subr.bf16.mxu0 0
    %3302 = vmatpush1.bf16.msra.mxu0 %v3095
    %3303 = vmatprep.subr.bf16.mxu0 0
    %3304 = vmatpush1.bf16.msra.mxu0 %v3096
    %3305 = vmatprep.subr.bf16.mxu0 0
    %3306 = vmatpush1.bf16.msra.mxu0 %v3097
    %3307 = vmatprep.subr.bf16.mxu0 0
    %3308 = vmatpush1.bf16.msra.mxu0 %v3098
    %3309 = vmatprep.subr.bf16.mxu0 0
    %3310 = vmatpush1.bf16.msra.mxu0 %v3099
    %3311 = vmatprep.subr.bf16.mxu0 0
    %3312 = vmatpush1.bf16.msra.mxu0 %v3100
    %3313 = vmatprep.subr.bf16.mxu0 0
    %3314 = vmatpush1.bf16.msra.mxu0 %v3101
    %3315 = vmatprep.subr.bf16.mxu0 0
    %3316 = vmatpush1.bf16.msra.mxu0 %v3102
    %3317 = vmatprep.subr.bf16.mxu0 0
    %3318 = vmatpush1.bf16.msra.mxu0 %v3103
    %3319 = vmatprep.subr.bf16.mxu0 0
    %3320 = vmatpush1.bf16.msra.mxu0 %v3104
    %3321 = vmatprep.mubr.bf16.mxu0 %v2649
    %3322 = vmatmul.mubr.bf16.gmra.mrb[0].mxu0 %v2648
    %v3323 = vpop.f32.mrb[0].mxu0
    %v3324 = vadd.f32 %v3284, %v3323
    %v3325 = vpop.f32.mrb[0].mxu0
    %v3326 = vpop.f32.mrb[0].mxu0
    %v3327 = vpop.f32.mrb[0].mxu0
    %3328 = vdwg.mxu0
    %vm3329 = vcmp.ge.f32.partialorder %v3324, 0.0
    %v3330 = vmul.f32 %v3324, 0.01
    %v3331 = vsel %vm3329, %v3324, %v3330
    %v3332 = vld [vmem:[%s11] sm:$0xff]
    %v3333 = vld [vmem:[%s11 + $0x8] sm:$0xff]
    %v3334 = vld [vmem:[%s11 + $0x10] sm:$0xff]
    %v3335 = vld [vmem:[%s11 + $0x18] sm:$0xff]
    %v3336 = vld [vmem:[%s11 + $0x20] sm:$0xff]
    %v3337 = vld [vmem:[%s11 + $0x28] sm:$0xff]
    %v3338 = vld [vmem:[%s11 + $0x30] sm:$0xff]
    %v3339 = vld [vmem:[%s11 + $0x38] sm:$0xff]
    %v3340 = vld [vmem:[%s11 + $0x40] sm:$0xff]
    %v3341 = vld [vmem:[%s11 + $0x48] sm:$0xff]
    %v3342 = vld [vmem:[%s11 + $0x50] sm:$0xff]
    %v3343 = vld [vmem:[%s11 + $0x58] sm:$0xff]
    %v3344 = vld [vmem:[%s11 + $0x60] sm:$0xff]
    %v3345 = vld [vmem:[%s11 + $0x68] sm:$0xff]
    %v3346 = vld [vmem:[%s11 + $0x70] sm:$0xff]
    %v3347 = vld [vmem:[%s11 + $0x78] sm:$0xff]
    %v3348 = vld [vmem:[%s12] sm:$0x1]
    %v3350 = vlaneseq
    %v3351 = vshrl.u32 %v3350, 7
    %v3352 = vsub.s32 0, %v3351
    %v3353 = vrot.slane %v3348, %v3352
    %3355 = vmatprep.subr.mxu0 0.0
    %3356 = vmatpush1.msra.mxu0 %v3332
    %3357 = vmatprep.subr.mxu0 0.0
    %3358 = vmatpush1.msra.mxu0 %v3333
    %3359 = vmatprep.subr.mxu0 0.0
    %3360 = vmatpush1.msra.mxu0 %v3334
    %3361 = vmatprep.subr.mxu0 0.0
    %3362 = vmatpush1.msra.mxu0 %v3335
    %3363 = vmatprep.subr.mxu0 0.0
    %3364 = vmatpush1.msra.mxu0 %v3336
    %3365 = vmatprep.subr.mxu0 0.0
    %3366 = vmatpush1.msra.mxu0 %v3337
    %3367 = vmatprep.subr.mxu0 0.0
    %3368 = vmatpush1.msra.mxu0 %v3338
    %3369 = vmatprep.subr.mxu0 0.0
    %3370 = vmatpush1.msra.mxu0 %v3339
    %3371 = vmatprep.subr.mxu0 0.0
    %3372 = vmatpush1.msra.mxu0 %v3340
    %3373 = vmatprep.subr.mxu0 0.0
    %3374 = vmatpush1.msra.mxu0 %v3341
    %3375 = vmatprep.subr.mxu0 0.0
    %3376 = vmatpush1.msra.mxu0 %v3342
    %3377 = vmatprep.subr.mxu0 0.0
    %3378 = vmatpush1.msra.mxu0 %v3343
    %3379 = vmatprep.subr.mxu0 0.0
    %3380 = vmatpush1.msra.mxu0 %v3344
    %3381 = vmatprep.subr.mxu0 0.0
    %3382 = vmatpush1.msra.mxu0 %v3345
    %3383 = vmatprep.subr.mxu0 0.0
    %3384 = vmatpush1.msra.mxu0 %v3346
    %3385 = vmatprep.subr.mxu0 0.0
    %3386 = vmatpush1.msra.mxu0 %v3347
    %3387 = vmatprep.subr.mxu0 0.0
    %3388 = vmatpush1.msra.mxu0 0.0
    %3389 = vmatprep.subr.mxu0 0.0
    %3390 = vmatpush1.msra.mxu0 0.0
    %3391 = vmatprep.subr.mxu0 0.0
    %3392 = vmatpush1.msra.mxu0 0.0
    %3393 = vmatprep.subr.mxu0 0.0
    %3394 = vmatpush1.msra.mxu0 0.0
    %3395 = vmatprep.subr.mxu0 0.0
    %3396 = vmatpush1.msra.mxu0 0.0
    %3397 = vmatprep.subr.mxu0 0.0
    %3398 = vmatpush1.msra.mxu0 0.0
    %3399 = vmatprep.subr.mxu0 0.0
    %3400 = vmatpush1.msra.mxu0 0.0
    %3401 = vmatprep.subr.mxu0 0.0
    %3402 = vmatpush1.msra.mxu0 0.0
    %3403 = vmatprep.subr.mxu0 0.0
    %3404 = vmatpush1.msra.mxu0 0.0
    %3405 = vmatprep.subr.mxu0 0.0
    %3406 = vmatpush1.msra.mxu0 0.0
    %3407 = vmatprep.subr.mxu0 0.0
    %3408 = vmatpush1.msra.mxu0 0.0
    %3409 = vmatprep.subr.mxu0 0.0
    %3410 = vmatpush1.msra.mxu0 0.0
    %3411 = vmatprep.subr.mxu0 0.0
    %3412 = vmatpush1.msra.mxu0 0.0
    %3413 = vmatprep.subr.mxu0 0.0
    %3414 = vmatpush1.msra.mxu0 0.0
    %3415 = vmatprep.subr.mxu0 0.0
    %3416 = vmatpush1.msra.mxu0 0.0
    %3417 = vmatprep.subr.mxu0 0.0
    %3418 = vmatpush1.msra.mxu0 0.0
    %3419 = vmatprep.mubr.f32.mxu0 0.0
    %3420 = vmatmul.mubr.f32.gmra.mrb[0].mxu0 %v3331
    %v3421 = vpop.f32.mrb[0].mxu0
    %v3422 = vadd.f32 %v3353, %v3421
    %v3423 = vpop.f32.mrb[0].mxu0
    %3424 = vdwg.mxu0
    %vm3425 = vcmask 41984
    %3426 = vst.msk [vmem:[#allocation14] sm:$0x3] %vm3425, %v3422
    // Predicated region
    $region82: #{tpu_custom_call.1} parent=1 // pred_check
      _
    $region83: #{tpu_custom_call.1} parent=1 // pred_check_branch
      %3428 = sbr.rel (0) target = $region85
    $region84: #{tpu_custom_call.1} parent=1 // pred_region
      %s3430 = ssub.s32 32, 32
      %3431 = vsyncadd [#allocation4], %s3430
      %s3433 = sshll.u32 [#allocation14], 4
      %s3434 = int_to_ptr.vmem [resolvable:$true] %s3433
      %3436 = dma.vmem_to_hbm [thread:$0]  %s3434, 32, %s13, [#allocation4]
    $region85: #{tpu_custom_call.1} parent=1 // pred_fallthru
      _
    // Predicated region
    $region86: #{tpu_custom_call.1} parent=1 // pred_check
      _
    $region87: #{tpu_custom_call.1} parent=1 // pred_check_branch
      %3438 = sbr.rel (0) target = $region89
    $region88: #{tpu_custom_call.1} parent=1 // pred_region
      %3439 = dma.done [#allocation4], 32
    $region89: #{tpu_custom_call.1} parent=1 // pred_fallthru
      _
    %3440 = vsyncpa [#allocation3], 1
    %3441 = vsyncpa [#allocation6], 1
    %3442 = vsyncpa [#allocation9], 1
    %3443 = vsyncpa [#allocation12], 1
    %3444 = vsyncpa [#allocation4], 1

</llo_original>
